<compile_context>
chip_gen: v7x
topology: tpu7x:2x2x1
jax: 0.10.0
libtpu: 0.0.40
codegen_flags: <defaults>
</compile_context>

<pallas_src>
import functools
import math

import jax
import jax.numpy as jnp
from jax import lax
from jax.experimental import pallas as pl
from jax.experimental.pallas import tpu as pltpu


_NEG_INF_FILL = -1000000000.0   # matches the PyTorch masked_fill constant


# --------------------------------------------------------------------------- #
# Helpers
# --------------------------------------------------------------------------- #
def _round_up(x, m):
    return ((x + m - 1) // m) * m


def _sublane_multiple(dtype):
    # dtype-dependent sublane packing: 8 rows (f32), 16 (bf16), 32 (int8/fp8)
    itemsize = jnp.dtype(dtype).itemsize
    return max(8, 32 // max(itemsize, 1))


def _vmem_capacity_bytes():
    try:
        return int(pltpu.get_tpu_info().vmem_capacity_bytes)
    except Exception:
        return 64 << 20          # conservative: v7x per-TensorCore VMEM


def _num_tensorcores():
    # Best-effort; only used to decide whether splitting the grid across
    # TensorCores is worth shrinking the batch block.
    try:
        info = pltpu.get_tpu_info()
        for attr in ("num_cores", "core_count", "num_tensorcores",
                     "tensorcores_per_chip", "cores_per_chip"):
            v = getattr(info, attr, None)
            if v:
                return int(v)
    except Exception:
        pass
    return 1


def _whole_s_step_bytes(bt, S, T, H, itemsize):
    """Per-grid-step VMEM estimate for the whole-S kernel: double-buffered
    input/output blocks plus the f32 intermediates (scores/e, transposed
    scores, unnormalized f32 output)."""
    t_lane = _round_up(max(T, 1), 128)
    io = (S * H + 2 * T * H) * itemsize + S * 4          # sent, slot, out, mask
    f32_tmp = (2 * S * t_lane + 3 * T * H) * 4
    return bt * (2 * io + f32_tmp)


def _tiled_step_bytes(bt, ts, T, H, itemsize):
    t_lane = _round_up(max(T, 1), 128)
    io = (ts * H + 2 * T * H) * itemsize + ts * 4
    f32_tmp = (2 * ts * t_lane + 3 * T * H) * 4
    scratch = (T * H + 2 * T) * 4                        # acc + m/l accumulators
    return bt * (2 * io + f32_tmp + scratch)


def _choose_block_batch(B, per_batch_bytes, vmem_budget, target_bytes, num_cores):
    divisors = [d for d in range(1, B + 1) if B % d == 0]
    fit = [d for d in divisors if d * per_batch_bytes <= vmem_budget] or [1]
    bt = None
    for d in fit:                        # smallest block reaching the target
        if d * per_batch_bytes >= target_bytes:
            bt = d
            break
    if bt is None:
        bt = fit[-1]                     # whole batch still under target
    # Keep >= num_cores grid steps only on multi-core (megacore) parts, and
    # only if the resulting blocks stay big enough to amortize step overhead.
    if num_cores >= 2 and B // bt < num_cores:
        cand = [d for d in fit if B // d >= num_cores]
        if cand:
            good = [d for d in cand if d * per_batch_bytes >= target_bytes // 2]
            bt = (good or cand)[-1]
    return bt


# --------------------------------------------------------------------------- #
# Kernels
# --------------------------------------------------------------------------- #
def _cross_encoder_kernel_whole(sent_ref, slot_ref, mask_ref, out_ref, *,
                                inv_sqrt_h, precision):
    sent = sent_ref[...]                                   # [Bt, S, H]
    slot = slot_ref[...]                                   # [Bt, T, H]
    mask = mask_ref[...]                                   # [Bt, S, 1]

    # scores[b, s, t]: the big sentence tile contracts on its LAST dim (clean
    # MXU LHS, never relaid out); only the tiny slot tile feeds the RHS.
    scores = lax.dot_general(
        sent, slot, (((2,), (2,)), ((0,), (0,))),
        preferred_element_type=jnp.float32,
        precision=precision)                               # [Bt, S, T] f32
    scores = scores * inv_sqrt_h
    scores = jnp.where(mask == 0.0, _NEG_INF_FILL, scores)

    # Small explicit transpose of the scores; softmax and the second matmul
    # then run in the compact [T, S] layout with [T, 1] lane broadcasts.
    scores = jnp.swapaxes(scores, -1, -2)                  # [Bt, T, S]

    m = jnp.max(scores, axis=-1, keepdims=True)            # [Bt, T, 1]
    e = jnp.exp(scores - m)                                # [Bt, T, S] f32
    denom = jnp.sum(e, axis=-1, keepdims=True)             # [Bt, T, 1]

    # Unnormalized weighted sum: clean NN batched matmul (no transposes).
    out = lax.dot_general(
        e.astype(sent.dtype), sent, (((2,), (1,)), ((0,), (0,))),
        preferred_element_type=jnp.float32,
        precision=precision)                               # [Bt, T, H] f32

    # Deferred, exact normalization on the tiny [Bt, T, 1] denominator.
    out_ref[...] = (out * (1.0 / denom)).astype(out_ref.dtype)


def _cross_encoder_kernel_stiled(sent_ref, slot_ref, mask_ref, out_ref,
                                 m_sc, l_sc, acc_sc, *, inv_sqrt_h, precision):
    # Flash-style online softmax over S tiles; batch axis is outer/parallel,
    # S axis is the inner/"arbitrary" reduction axis.
    s_idx = pl.program_id(1)

    @pl.when(s_idx == 0)
    def _():
        m_sc[...] = jnp.full(m_sc.shape, -jnp.inf, m_sc.dtype)
        l_sc[...] = jnp.zeros(l_sc.shape, l_sc.dtype)
        acc_sc[...] = jnp.zeros(acc_sc.shape, acc_sc.dtype)

    sent = sent_ref[...]                                   # [Bt, Ts, H]
    slot = slot_ref[...]                                   # [Bt, T, H]
    mask = mask_ref[...]                                   # [Bt, Ts, 1]

    scores = lax.dot_general(
        sent, slot, (((2,), (2,)), ((0,), (0,))),
        preferred_element_type=jnp.float32,
        precision=precision)                               # [Bt, Ts, T] f32
    scores = scores * inv_sqrt_h
    scores = jnp.where(mask == 0.0, _NEG_INF_FILL, scores)
    scores = jnp.swapaxes(scores, -1, -2)                  # [Bt, T, Ts]

    m_prev = m_sc[...]
    m_new = jnp.maximum(m_prev, jnp.max(scores, axis=-1, keepdims=True))
    p = jnp.exp(scores - m_new)                            # [Bt, T, Ts]
    alpha = jnp.exp(m_prev - m_new)                        # [Bt, T, 1]
    l_sc[...] = alpha * l_sc[...] + jnp.sum(p, axis=-1, keepdims=True)

    pv = lax.dot_general(
        p.astype(sent.dtype), sent, (((2,), (1,)), ((0,), (0,))),
        preferred_element_type=jnp.float32,
        precision=precision)                               # [Bt, T, H] f32
    acc_sc[...] = alpha * acc_sc[...] + pv
    m_sc[...] = m_new

    @pl.when(s_idx == pl.num_programs(1) - 1)
    def _():
        out_ref[...] = (acc_sc[...] * (1.0 / l_sc[...])).astype(out_ref.dtype)


# --------------------------------------------------------------------------- #
# Wrapper
# --------------------------------------------------------------------------- #
def sentences_slot_cross_encoder(sentences, slots, mask_sentences, *,
                                 block_batch=None, block_s=None,
                                 compute_dtype=None, precision=None,
                                 target_step_bytes=8 << 20):
    """
    sentences      : [B, S, H]
    slots          : [B, T, H]
    mask_sentences : [B, S]  (1 = attend, 0 = masked)
    returns        : [B, T, H]
    """
    B, S, H = sentences.shape
    Bs, T, Hs = slots.shape
    assert Bs == B and Hs == H and mask_sentences.shape == (B, S)

    if compute_dtype is not None:          # optional bf16 streaming of inputs
        sentences = sentences.astype(compute_dtype)
        slots = slots.astype(compute_dtype)

    dtype = sentences.dtype
    itemsize = jnp.dtype(dtype).itemsize
    inv_sqrt_h = 1.0 / math.sqrt(H)

    # Mask in f32, shaped [B, S, 1] so it lane-broadcasts over the slot axis.
    mask3 = mask_sentences.astype(jnp.float32).reshape(B, S, 1)

    vmem_cap = _vmem_capacity_bytes()
    num_cores = _num_tensorcores()
    # ~2x headroom for compiler-internal scratch (v7x: ~48 MiB usable).
    vmem_budget = max(8 << 20, min(vmem_cap - (16 << 20), 96 << 20))

    use_tiled = (block_s is not None or
                 _whole_s_step_bytes(1, S, T, H, itemsize) > vmem_budget)

    if not use_tiled:
        # ------------------------- whole-S path --------------------------- #
        per_batch = _whole_s_step_bytes(1, S, T, H, itemsize)
        if block_batch is not None:
            bt = max(d for d in range(1, min(block_batch, B) + 1) if B % d == 0)
        else:
            bt = _choose_block_batch(B, per_batch, vmem_budget,
                                     target_step_bytes, num_cores)
        grid = (B // bt,)
        kernel = functools.partial(_cross_encoder_kernel_whole,
                                   inv_sqrt_h=inv_sqrt_h, precision=precision)
        in_specs = [
            pl.BlockSpec((bt, S, H), lambda b: (b, 0, 0)),
            pl.BlockSpec((bt, T, H), lambda b: (b, 0, 0)),
            pl.BlockSpec((bt, S, 1), lambda b: (b, 0, 0)),
        ]
        out_specs = pl.BlockSpec((bt, T, H), lambda b: (b, 0, 0))
        scratch_shapes = []
        dim_sem = ("parallel",)
        est_vmem = _whole_s_step_bytes(bt, S, T, H, itemsize)
        sent_in, mask_in = sentences, mask3
    else:
        # -------------------- S-tiled (online softmax) -------------------- #
        sub = _sublane_multiple(dtype)
        if block_batch is not None:
            bt = max(d for d in range(1, min(block_batch, B) + 1) if B % d == 0)
        else:
            bt = 1
        if block_s is not None:
            ts = _round_up(min(block_s, S), sub)
        else:
            ts = sub
            while (ts * 2 <= _round_up(S, sub)
                   and _tiled_step_bytes(bt, ts * 2, T, H, itemsize)
                   <= min(vmem_budget, target_step_bytes)):
                ts *= 2
        ts = min(ts, _round_up(S, sub))
        s_pad = _round_up(S, ts)
        sent_in, mask_in = sentences, mask3
        if s_pad != S:
            # Only this long-sequence path ever pads; padded rows carry
            # mask == 0 so they contribute exactly zero softmax weight.
            sent_in = jnp.pad(sentences, ((0, 0), (0, s_pad - S), (0, 0)))
            mask_in = jnp.pad(mask3, ((0, 0), (0, s_pad - S), (0, 0)))
        grid = (B // bt, s_pad // ts)
        kernel = functools.partial(_cross_encoder_kernel_stiled,
                                   inv_sqrt_h=inv_sqrt_h, precision=precision)
        in_specs = [
            pl.BlockSpec((bt, ts, H), lambda b, s: (b, s, 0)),
            pl.BlockSpec((bt, T, H), lambda b, s: (b, 0, 0)),
            pl.BlockSpec((bt, ts, 1), lambda b, s: (b, s, 0)),
        ]
        out_specs = pl.BlockSpec((bt, T, H), lambda b, s: (b, 0, 0))
        scratch_shapes = [
            pltpu.VMEM((bt, T, 1), jnp.float32),   # running max
            pltpu.VMEM((bt, T, 1), jnp.float32),   # running denominator
            pltpu.VMEM((bt, T, H), jnp.float32),   # unnormalized accumulator
        ]
        dim_sem = ("parallel", "arbitrary")
        est_vmem = _tiled_step_bytes(bt, ts, T, H, itemsize)

    compiler_kwargs = dict(dimension_semantics=dim_sem)
    if est_vmem > (12 << 20):   # only raise the scoped limit when required
        compiler_kwargs["vmem_limit_bytes"] = int(
            min(vmem_cap - (8 << 20), max(int(est_vmem * 1.5), 32 << 20)))

    cost = pl.CostEstimate(
        flops=int(4 * B * T * S * H),                     # two batched matmuls
        transcendentals=int(B * T * S),                   # exp
        bytes_accessed=int((sent_in.size + slots.size + B * T * H) * itemsize
                           + mask_in.size * 4),
    )

    out = pl.pallas_call(
        kernel,
        out_shape=jax.ShapeDtypeStruct((B, T, H), dtype),
        grid_spec=pltpu.PrefetchScalarGridSpec(
            num_scalar_prefetch=0,
            grid=grid,
            in_specs=in_specs,
            out_specs=out_specs,
            scratch_shapes=scratch_shapes,
        ),
        compiler_params=pltpu.CompilerParams(**compiler_kwargs),
        cost_estimate=cost,
    )(sent_in, slots, mask_in)

    return out


# --------------------------------------------------------------------------- #
# Pure-JAX reference (mirrors the PyTorch forward exactly)
# --------------------------------------------------------------------------- #
def _reference(sentences, slots, mask_sentences, precision=None):
    H = sentences.shape[-1]
    scores = jnp.matmul(sentences, jnp.swapaxes(slots, -1, -2),
                        precision=precision) / math.sqrt(H)
    scores = jnp.swapaxes(scores, -1, -2)                  # [B, T, S]
    mask = mask_sentences[:, None, :]
    scores = jnp.where(mask == 0, _NEG_INF_FILL, scores)
    attn = jax.nn.softmax(scores, axis=-1)                 # [B, T, S]
    return jnp.einsum("bts,bsh->bth", attn, sentences, precision=precision)


if __name__ == "__main__":
    key = jax.random.PRNGKey(0)
    # Use HIGHEST precision in BOTH kernel and reference so the comparison is
    # apples-to-apples f32 (the kernel defaults to fast MXU precision in prod).
    hi = jax.lax.Precision.HIGHEST

    # --- Case 1: whole-sequence path (typical small DiCoS shapes). ---------
    B, S, T, H = 2, 8, 4, 32    # batch, seqLen, slotTypeNum, hidden_size
    k1, k2, k3, k4, k5 = jax.random.split(key, 5)
    sentences = jax.random.normal(k1, (B, S, H), dtype=jnp.float32)
    slots = jax.random.normal(k2, (B, T, H), dtype=jnp.float32)
    mask = (jax.random.uniform(k3, (B, S)) > 0.3).astype(jnp.float32)
    mask = mask.at[:, 0].set(1.0)       # at least one valid position per row

    out = jax.block_until_ready(
        sentences_slot_cross_encoder(sentences, slots, mask, precision=hi))
    ref = _reference(sentences, slots, mask, precision=hi)
    assert out.shape == (B, T, H)
    assert jnp.allclose(out, ref, atol=2e-3, rtol=2e-3), "whole-S path mismatch"

    # --- Case 2: force the S-tiled (online-softmax) path. ------------------
    S2 = 32
    sentences2 = jax.random.normal(k4, (B, S2, H), dtype=jnp.float32)
    mask2 = (jax.random.uniform(k5, (B, S2)) > 0.3).astype(jnp.float32)
    mask2 = mask2.at[:, 0].set(1.0)
    out2 = jax.block_until_ready(
        sentences_slot_cross_encoder(sentences2, slots, mask2,
                                     block_s=8, precision=hi))
    ref2 = _reference(sentences2, slots, mask2, precision=hi)
    assert out2.shape == (B, T, H)
    assert jnp.allclose(out2, ref2, atol=2e-3, rtol=2e-3), "S-tiled path mismatch"

    print("KERNEL_OK")
</pallas_src>

<mosaic_0001>
module attributes {stable_mosaic.version = 11 : i64} {
  func.func @_cross_encoder_kernel_whole(%arg0: i32, %arg1: memref<2x8x32xf32, #tpu.memory_space<vmem>>, %arg2: memref<2x4x32xf32, #tpu.memory_space<vmem>>, %arg3: memref<2x8x1xf32, #tpu.memory_space<vmem>>, %arg4: memref<2x4x32xf32, #tpu.memory_space<vmem>>) attributes {dimension_semantics = [#tpu.dimension_semantics<parallel>], iteration_bounds = array<i64: 1>, scalar_prefetch = 0 : i64, scratch_operands = 0 : i64, tpu.core_type = #tpu.core_type<tc>, window_params = [{transform_indices = @transform_0, window_bounds = array<i64: 2, 8, 32>}, {transform_indices = @transform_1, window_bounds = array<i64: 2, 4, 32>}, {transform_indices = @transform_2, window_bounds = array<i64: 2, 8, 1>}, {transform_indices = @transform_3, window_bounds = array<i64: 2, 4, 32>}]} {
    %c0 = arith.constant 0 : index
    %c0_0 = arith.constant 0 : index
    %c0_1 = arith.constant 0 : index
    %0 = vector.load %arg1[%c0, %c0_0, %c0_1] : memref<2x8x32xf32, #tpu.memory_space<vmem>>, vector<2x8x32xf32>
    %c0_2 = arith.constant 0 : index
    %c0_3 = arith.constant 0 : index
    %c0_4 = arith.constant 0 : index
    %1 = vector.load %arg2[%c0_2, %c0_3, %c0_4] : memref<2x4x32xf32, #tpu.memory_space<vmem>>, vector<2x4x32xf32>
    %c0_5 = arith.constant 0 : index
    %c0_6 = arith.constant 0 : index
    %c0_7 = arith.constant 0 : index
    %2 = vector.load %arg3[%c0_5, %c0_6, %c0_7] : memref<2x8x1xf32, #tpu.memory_space<vmem>>, vector<2x8x1xf32>
    %cst = arith.constant dense<0.000000e+00> : vector<2x8x4xf32>
    %3 = tpu.matmul %0, %1, %cst {dimension_numbers = #tpu.dot_dimension_numbers<[2], [2], [1], [1], [0, 0, 0, 1, 1, 1], [0], [0]>, precision = #tpu.contract_precision<fp32>} : vector<2x8x32xf32>, vector<2x4x32xf32>, vector<2x8x4xf32> -> vector<2x8x4xf32>
    %cst_8 = arith.constant 0.176776692 : f32
    %4 = vector.broadcast %cst_8 : f32 to vector<2x8x4xf32>
    %5 = arith.mulf %3, %4 : vector<2x8x4xf32>
    %cst_9 = arith.constant 0.000000e+00 : f32
    %6 = vector.broadcast %cst_9 : f32 to vector<2x8x1xf32>
    %7 = arith.cmpf oeq, %2, %6 : vector<2x8x1xf32>
    %cst_10 = arith.constant -1.000000e+09 : f32
    %8 = vector.shape_cast %7 : vector<2x8x1xi1> to vector<2x8x1xi1>
    %9 = vector.broadcast %8 : vector<2x8x1xi1> to vector<2x8x4xi1>
    %10 = vector.broadcast %cst_10 : f32 to vector<2x8x4xf32>
    %11 = arith.select %9, %10, %5 : vector<2x8x4xi1>, vector<2x8x4xf32>
    %12 = tpu.transpose %11, [0, 2, 1] : vector<2x8x4xf32> -> vector<2x4x8xf32>
    %cst_11 = arith.constant dense<0xFF800000> : vector<2x4xf32>
    %13 = vector.multi_reduction <maximumf>, %12, %cst_11 [2] : vector<2x4x8xf32> to vector<2x4xf32>
    %14 = vector.shape_cast %13 : vector<2x4xf32> to vector<2x4x1xf32>
    %15 = vector.broadcast %14 : vector<2x4x1xf32> to vector<2x4x8xf32>
    %16 = arith.subf %12, %15 : vector<2x4x8xf32>
    %17 = math.exp %16 : vector<2x4x8xf32>
    %cst_12 = arith.constant dense<0.000000e+00> : vector<2x4xf32>
    %18 = vector.multi_reduction <add>, %17, %cst_12 [2] : vector<2x4x8xf32> to vector<2x4xf32>
    %19 = vector.shape_cast %18 : vector<2x4xf32> to vector<2x4x1xf32>
    %cst_13 = arith.constant dense<0.000000e+00> : vector<2x4x32xf32>
    %20 = tpu.matmul %17, %0, %cst_13 {dimension_numbers = #tpu.dot_dimension_numbers<[2], [1], [1], [2], [0, 0, 0, 1, 1, 2], [0], [0]>, precision = #tpu.contract_precision<fp32>} : vector<2x4x8xf32>, vector<2x8x32xf32>, vector<2x4x32xf32> -> vector<2x4x32xf32>
    %cst_14 = arith.constant 1.000000e+00 : f32
    %21 = vector.broadcast %cst_14 : f32 to vector<2x4x1xf32>
    %22 = arith.divf %21, %19 : vector<2x4x1xf32>
    %23 = vector.broadcast %22 : vector<2x4x1xf32> to vector<2x4x32xf32>
    %24 = arith.mulf %20, %23 : vector<2x4x32xf32>
    %c0_15 = arith.constant 0 : index
    %c0_16 = arith.constant 0 : index
    %c0_17 = arith.constant 0 : index
    %25 = vector.load %arg4[%c0_15, %c0_16, %c0_17] : memref<2x4x32xf32, #tpu.memory_space<vmem>>, vector<2x4x32xf32>
    tpu.vector_store %arg4[%c0_15, %c0_16, %c0_17], %24 {strides = array<i32>} : memref<2x4x32xf32, #tpu.memory_space<vmem>>, vector<2x4x32xf32>,
    return
  }
  func.func @transform_0(%arg0: i32) -> (i32, i32, i32) {
    %c0_i32 = arith.constant 0 : i32
    %c0_i32_0 = arith.constant 0 : i32
    %c0_i32_1 = arith.constant 0 : i32
    return %arg0, %c0_i32, %c0_i32_0 : i32, i32, i32
  }
  func.func @transform_1(%arg0: i32) -> (i32, i32, i32) {
    %c0_i32 = arith.constant 0 : i32
    %c0_i32_0 = arith.constant 0 : i32
    %c0_i32_1 = arith.constant 0 : i32
    return %arg0, %c0_i32, %c0_i32_0 : i32, i32, i32
  }
  func.func @transform_2(%arg0: i32) -> (i32, i32, i32) {
    %c0_i32 = arith.constant 0 : i32
    %c0_i32_0 = arith.constant 0 : i32
    %c0_i32_1 = arith.constant 0 : i32
    return %arg0, %c0_i32, %c0_i32_0 : i32, i32, i32
  }
  func.func @transform_3(%arg0: i32) -> (i32, i32, i32) {
    %c0_i32 = arith.constant 0 : i32
    %c0_i32_0 = arith.constant 0 : i32
    %c0_i32_1 = arith.constant 0 : i32
    return %arg0, %c0_i32, %c0_i32_0 : i32, i32, i32
  }
}

</mosaic_0001>

<llo_original>
// kernel: tpu_custom_call.1
$region0: #{tpu_custom_call.1}
  #allocation0 [shape = 'u32[]', space=smem, size = 0x4, offset = 0x4, fixed_abs, tag = 'smem constant byte address 0x4 - core index']
  #allocation1 [shape = 'u32[144,128]{1,0:T(1,128)}', space=vmem, size = 0x12000, scoped, tag = 'internal scratch']
  %s0 = inlined_call_operand.vmem [shape: f32[2,8,32], index: 0, kind: input, shape index: {}]
  %s1 = inlined_call_operand.hbm [shape: f32[2,4,32], index: 1, kind: input, shape index: {}]
  %s2 = inlined_call_operand.vmem [shape: f32[2,8,1], index: 2, kind: input, shape index: {}]
  %s3 = inlined_call_operand.hbm [shape: f32[2,4,32], index: 3, kind: output, shape index: {}]
  %s4 = sld [smem:[#allocation0]]
  $region26: #{tpu_custom_call.1} parent=0
    _
  %s6 = ssub.s32 1, %s4
  %s7 = scalar_select 0, %s6, %s4
  $region1: #{tpu_custom_call.1} parent=0
    #allocation2 [shape = 'u8[4096]{0}', space=vmem, size = 0x1000, scoped, tag = 'input window, operand 1, single buffered']
    #allocation3 [shape = 's32[1]{0}', space=sflag, size = 0x4, scoped, tag = 'scoped memory for tpu_custom_call.1']
    #allocation4 [shape = 's32[1]{0}', space=sflag, size = 0x4, scoped, tag = 'scoped memory for tpu_custom_call.1']
    #allocation5 [shape = 'u8[4096]{0}', space=vmem, size = 0x1000, scoped, tag = 'output window, operand 0, single buffered']
    %8 = vsyncpa [#allocation3], 0
    %9 = vsyncpa [#allocation4], 0
    // Predicated region
    $region2: #{tpu_custom_call.1} parent=1 // pred_check
      _
    $region3: #{tpu_custom_call.1} parent=1 // pred_check_branch
      %11 = sbr.rel (0) target = $region5
    $region4: #{tpu_custom_call.1} parent=1 // pred_region
      _
    $region5: #{tpu_custom_call.1} parent=1 // pred_fallthru
      _
    // Predicated region
    $region6: #{tpu_custom_call.1} parent=1 // pred_check
      _
    $region7: #{tpu_custom_call.1} parent=1 // pred_check_branch
      %13 = sbr.rel (0) target = $region9
    $region8: #{tpu_custom_call.1} parent=1 // pred_region
      %s15 = ssub.s32 128, 128
      %16 = vsyncadd [#allocation3], %s15
      %s17 = sshll.u32 [#allocation2], 4
      %s18 = int_to_ptr.vmem [resolvable:$true] %s17
      %23 = dma.hbm_to_vmem [thread:$0]  %s1, 128, %s18, [#allocation3], 64, 64, 4
    $region9: #{tpu_custom_call.1} parent=1 // pred_fallthru
      _
    // Predicated region
    $region10: #{tpu_custom_call.1} parent=1 // pred_check
      _
    $region11: #{tpu_custom_call.1} parent=1 // pred_check_branch
      %25 = sbr.rel (0) target = $region13
    $region12: #{tpu_custom_call.1} parent=1 // pred_region
      _
    $region13: #{tpu_custom_call.1} parent=1 // pred_fallthru
      _
    // Predicated region
    $region14: #{tpu_custom_call.1} parent=1 // pred_check
      _
    $region15: #{tpu_custom_call.1} parent=1 // pred_check_branch
      %27 = sbr.rel (0) target = $region17
    $region16: #{tpu_custom_call.1} parent=1 // pred_region
      %28 = dma.done [#allocation3], 128
    $region17: #{tpu_custom_call.1} parent=1 // pred_fallthru
      _
    %v29 = vld [vmem:[%s0] sm:$0xff]
    %v30 = vld [vmem:[%s0 + $0x8] sm:$0xff]
    %v31 = vld [vmem:[#allocation2] sm:$0xf]
    %v32 = vld [vmem:[#allocation2 + $0x4] sm:$0xf]
    %v33 = vld [vmem:[%s2] sm:$0xff]
    %v34 = vld [vmem:[%s2 + $0x8] sm:$0xff]
    %vm35 = vcmask 261120
    %v37 = vsel %vm35, %v29, 0
    %v40 = vsel %vm35, %v31, 0
    %42 = vmatprep.subr.mxu0 0.0
    %v43 = vand.u32 %v40, 4294901760
    %44 = vmatpush1.xpose.msra.mxu0 %v43
    %45 = vmatprep.subr.mxu0 0.0
    %46 = vmatpush1.xpose.msra.mxu0 0.0
    %47 = vmatprep.subr.mxu0 0.0
    %48 = vmatpush1.xpose.msra.mxu0 0.0
    %49 = vmatprep.subr.mxu0 0.0
    %50 = vmatpush1.xpose.msra.mxu0 0.0
    %51 = vmatprep.subr.mxu0 0.0
    %52 = vmatpush1.xpose.msra.mxu0 0.0
    %53 = vmatprep.subr.mxu0 0.0
    %54 = vmatpush1.xpose.msra.mxu0 0.0
    %55 = vmatprep.subr.mxu0 0.0
    %56 = vmatpush1.xpose.msra.mxu0 0.0
    %57 = vmatprep.subr.mxu0 0.0
    %58 = vmatpush1.xpose.msra.mxu0 0.0
    %59 = vmatprep.subr.mxu0 0.0
    %60 = vmatpush1.xpose.msra.mxu0 0.0
    %61 = vmatprep.subr.mxu0 0.0
    %62 = vmatpush1.xpose.msra.mxu0 0.0
    %63 = vmatprep.subr.mxu0 0.0
    %64 = vmatpush1.xpose.msra.mxu0 0.0
    %65 = vmatprep.subr.mxu0 0.0
    %66 = vmatpush1.xpose.msra.mxu0 0.0
    %67 = vmatprep.subr.mxu0 0.0
    %68 = vmatpush1.xpose.msra.mxu0 0.0
    %69 = vmatprep.subr.mxu0 0.0
    %70 = vmatpush1.xpose.msra.mxu0 0.0
    %71 = vmatprep.subr.mxu0 0.0
    %72 = vmatpush1.xpose.msra.mxu0 0.0
    %73 = vmatprep.subr.mxu0 0.0
    %74 = vmatpush1.xpose.msra.mxu0 0.0
    %75 = vmatprep.subr.mxu0 0.0
    %76 = vmatpush1.xpose.msra.mxu0 0.0
    %77 = vmatprep.subr.mxu0 0.0
    %78 = vmatpush1.xpose.msra.mxu0 0.0
    %79 = vmatprep.subr.mxu0 0.0
    %80 = vmatpush1.xpose.msra.mxu0 0.0
    %81 = vmatprep.subr.mxu0 0.0
    %82 = vmatpush1.xpose.msra.mxu0 0.0
    %83 = vmatprep.subr.mxu0 0.0
    %84 = vmatpush1.xpose.msra.mxu0 0.0
    %85 = vmatprep.subr.mxu0 0.0
    %86 = vmatpush1.xpose.msra.mxu0 0.0
    %87 = vmatprep.subr.mxu0 0.0
    %88 = vmatpush1.xpose.msra.mxu0 0.0
    %89 = vmatprep.subr.mxu0 0.0
    %90 = vmatpush1.xpose.msra.mxu0 0.0
    %91 = vmatprep.subr.mxu0 0.0
    %92 = vmatpush1.xpose.msra.mxu0 0.0
    %93 = vmatprep.subr.mxu0 0.0
    %94 = vmatpush1.xpose.msra.mxu0 0.0
    %95 = vmatprep.subr.mxu0 0.0
    %96 = vmatpush1.xpose.msra.mxu0 0.0
    %97 = vmatprep.subr.mxu0 0.0
    %98 = vmatpush1.xpose.msra.mxu0 0.0
    %99 = vmatprep.subr.mxu0 0.0
    %100 = vmatpush1.xpose.msra.mxu0 0.0
    %101 = vmatprep.subr.mxu0 0.0
    %102 = vmatpush1.xpose.msra.mxu0 0.0
    %103 = vmatprep.subr.mxu0 0.0
    %104 = vmatpush1.xpose.msra.mxu0 0.0
    %105 = vmatprep.subr.mxu0 0.0
    %106 = vmatpush1.xpose.msra.mxu0 0.0
    %107 = vmatprep.mubr.f32.mxu0 0.0
    %v108 = vand.u32 %v37, 4294901760
    %v109 = vsub.f32 %v37, %v108
    %v110 = vand.u32 %v109, 4294901760
    %v111 = vsub.f32 %v109, %v110
    %v112 = vand.u32 %v111, 4294901760
    %113 = vmatmul.mubr.f32.gmra.mrb[0].mxu0 %v112
    %v114 = vpop.f32.mrb[0].mxu0
    %v115 = vadd.f32 0.0, %v114
    %v116 = vpop.f32.mrb[0].mxu0
    %117 = vdwg.mxu0
    %118 = vmatprep.subr.mxu0 0.0
    %v119 = vand.u32 %v40, 4294901760
    %v120 = vsub.f32 %v40, %v119
    %v121 = vand.u32 %v120, 4294901760
    %v122 = vsub.f32 %v120, %v121
    %v123 = vand.u32 %v122, 4294901760
    %124 = vmatpush1.xpose.msra.mxu0 %v123
    %125 = vmatprep.subr.mxu0 0.0
    %126 = vmatpush1.xpose.msra.mxu0 0.0
    %127 = vmatprep.subr.mxu0 0.0
    %128 = vmatpush1.xpose.msra.mxu0 0.0
    %129 = vmatprep.subr.mxu0 0.0
    %130 = vmatpush1.xpose.msra.mxu0 0.0
    %131 = vmatprep.subr.mxu0 0.0
    %132 = vmatpush1.xpose.msra.mxu0 0.0
    %133 = vmatprep.subr.mxu0 0.0
    %134 = vmatpush1.xpose.msra.mxu0 0.0
    %135 = vmatprep.subr.mxu0 0.0
    %136 = vmatpush1.xpose.msra.mxu0 0.0
    %137 = vmatprep.subr.mxu0 0.0
    %138 = vmatpush1.xpose.msra.mxu0 0.0
    %139 = vmatprep.subr.mxu0 0.0
    %140 = vmatpush1.xpose.msra.mxu0 0.0
    %141 = vmatprep.subr.mxu0 0.0
    %142 = vmatpush1.xpose.msra.mxu0 0.0
    %143 = vmatprep.subr.mxu0 0.0
    %144 = vmatpush1.xpose.msra.mxu0 0.0
    %145 = vmatprep.subr.mxu0 0.0
    %146 = vmatpush1.xpose.msra.mxu0 0.0
    %147 = vmatprep.subr.mxu0 0.0
    %148 = vmatpush1.xpose.msra.mxu0 0.0
    %149 = vmatprep.subr.mxu0 0.0
    %150 = vmatpush1.xpose.msra.mxu0 0.0
    %151 = vmatprep.subr.mxu0 0.0
    %152 = vmatpush1.xpose.msra.mxu0 0.0
    %153 = vmatprep.subr.mxu0 0.0
    %154 = vmatpush1.xpose.msra.mxu0 0.0
    %155 = vmatprep.subr.mxu0 0.0
    %156 = vmatpush1.xpose.msra.mxu0 0.0
    %157 = vmatprep.subr.mxu0 0.0
    %158 = vmatpush1.xpose.msra.mxu0 0.0
    %159 = vmatprep.subr.mxu0 0.0
    %160 = vmatpush1.xpose.msra.mxu0 0.0
    %161 = vmatprep.subr.mxu0 0.0
    %162 = vmatpush1.xpose.msra.mxu0 0.0
    %163 = vmatprep.subr.mxu0 0.0
    %164 = vmatpush1.xpose.msra.mxu0 0.0
    %165 = vmatprep.subr.mxu0 0.0
    %166 = vmatpush1.xpose.msra.mxu0 0.0
    %167 = vmatprep.subr.mxu0 0.0
    %168 = vmatpush1.xpose.msra.mxu0 0.0
    %169 = vmatprep.subr.mxu0 0.0
    %170 = vmatpush1.xpose.msra.mxu0 0.0
    %171 = vmatprep.subr.mxu0 0.0
    %172 = vmatpush1.xpose.msra.mxu0 0.0
    %173 = vmatprep.subr.mxu0 0.0
    %174 = vmatpush1.xpose.msra.mxu0 0.0
    %175 = vmatprep.subr.mxu0 0.0
    %176 = vmatpush1.xpose.msra.mxu0 0.0
    %177 = vmatprep.subr.mxu0 0.0
    %178 = vmatpush1.xpose.msra.mxu0 0.0
    %179 = vmatprep.subr.mxu0 0.0
    %180 = vmatpush1.xpose.msra.mxu0 0.0
    %181 = vmatprep.subr.mxu0 0.0
    %182 = vmatpush1.xpose.msra.mxu0 0.0
    %183 = vmatprep.subr.mxu0 0.0
    %184 = vmatpush1.xpose.msra.mxu0 0.0
    %185 = vmatprep.subr.mxu0 0.0
    %186 = vmatpush1.xpose.msra.mxu0 0.0
    %187 = vmatprep.mubr.f32.mxu0 0.0
    %v188 = vand.u32 %v37, 4294901760
    %189 = vmatmul.mubr.f32.gmra.mrb[0].mxu0 %v188
    %v190 = vpop.f32.mrb[0].mxu0
    %v191 = vadd.f32 %v115, %v190
    %v192 = vpop.f32.mrb[0].mxu0
    %193 = vdwg.mxu0
    %194 = vmatprep.subr.mxu0 0.0
    %v195 = vand.u32 %v40, 4294901760
    %v196 = vsub.f32 %v40, %v195
    %197 = vmatpush1.xpose.msra.mxu0 %v196
    %198 = vmatprep.subr.mxu0 0.0
    %199 = vmatpush1.xpose.msra.mxu0 0.0
    %200 = vmatprep.subr.mxu0 0.0
    %201 = vmatpush1.xpose.msra.mxu0 0.0
    %202 = vmatprep.subr.mxu0 0.0
    %203 = vmatpush1.xpose.msra.mxu0 0.0
    %204 = vmatprep.subr.mxu0 0.0
    %205 = vmatpush1.xpose.msra.mxu0 0.0
    %206 = vmatprep.subr.mxu0 0.0
    %207 = vmatpush1.xpose.msra.mxu0 0.0
    %208 = vmatprep.subr.mxu0 0.0
    %209 = vmatpush1.xpose.msra.mxu0 0.0
    %210 = vmatprep.subr.mxu0 0.0
    %211 = vmatpush1.xpose.msra.mxu0 0.0
    %212 = vmatprep.subr.mxu0 0.0
    %213 = vmatpush1.xpose.msra.mxu0 0.0
    %214 = vmatprep.subr.mxu0 0.0
    %215 = vmatpush1.xpose.msra.mxu0 0.0
    %216 = vmatprep.subr.mxu0 0.0
    %217 = vmatpush1.xpose.msra.mxu0 0.0
    %218 = vmatprep.subr.mxu0 0.0
    %219 = vmatpush1.xpose.msra.mxu0 0.0
    %220 = vmatprep.subr.mxu0 0.0
    %221 = vmatpush1.xpose.msra.mxu0 0.0
    %222 = vmatprep.subr.mxu0 0.0
    %223 = vmatpush1.xpose.msra.mxu0 0.0
    %224 = vmatprep.subr.mxu0 0.0
    %225 = vmatpush1.xpose.msra.mxu0 0.0
    %226 = vmatprep.subr.mxu0 0.0
    %227 = vmatpush1.xpose.msra.mxu0 0.0
    %228 = vmatprep.subr.mxu0 0.0
    %229 = vmatpush1.xpose.msra.mxu0 0.0
    %230 = vmatprep.subr.mxu0 0.0
    %231 = vmatpush1.xpose.msra.mxu0 0.0
    %232 = vmatprep.subr.mxu0 0.0
    %233 = vmatpush1.xpose.msra.mxu0 0.0
    %234 = vmatprep.subr.mxu0 0.0
    %235 = vmatpush1.xpose.msra.mxu0 0.0
    %236 = vmatprep.subr.mxu0 0.0
    %237 = vmatpush1.xpose.msra.mxu0 0.0
    %238 = vmatprep.subr.mxu0 0.0
    %239 = vmatpush1.xpose.msra.mxu0 0.0
    %240 = vmatprep.subr.mxu0 0.0
    %241 = vmatpush1.xpose.msra.mxu0 0.0
    %242 = vmatprep.subr.mxu0 0.0
    %243 = vmatpush1.xpose.msra.mxu0 0.0
    %244 = vmatprep.subr.mxu0 0.0
    %245 = vmatpush1.xpose.msra.mxu0 0.0
    %246 = vmatprep.subr.mxu0 0.0
    %247 = vmatpush1.xpose.msra.mxu0 0.0
    %248 = vmatprep.subr.mxu0 0.0
    %249 = vmatpush1.xpose.msra.mxu0 0.0
    %250 = vmatprep.subr.mxu0 0.0
    %251 = vmatpush1.xpose.msra.mxu0 0.0
    %252 = vmatprep.subr.mxu0 0.0
    %253 = vmatpush1.xpose.msra.mxu0 0.0
    %254 = vmatprep.subr.mxu0 0.0
    %255 = vmatpush1.xpose.msra.mxu0 0.0
    %256 = vmatprep.subr.mxu0 0.0
    %257 = vmatpush1.xpose.msra.mxu0 0.0
    %258 = vmatprep.subr.mxu0 0.0
    %259 = vmatpush1.xpose.msra.mxu0 0.0
    %260 = vmatprep.mubr.f32.mxu0 0.0
    %v261 = vand.u32 %v37, 4294901760
    %v262 = vsub.f32 %v37, %v261
    %263 = vmatmul.mubr.f32.gmra.mrb[0].mxu0 %v262
    %v264 = vpop.f32.mrb[0].mxu0
    %v265 = vadd.f32 %v191, %v264
    %v266 = vpop.f32.mrb[0].mxu0
    %267 = vdwg.mxu0
    %268 = vmatprep.subr.mxu0 0.0
    %v269 = vand.u32 %v40, 4294901760
    %270 = vmatpush1.xpose.msra.mxu0 %v269
    %271 = vmatprep.subr.mxu0 0.0
    %272 = vmatpush1.xpose.msra.mxu0 0.0
    %273 = vmatprep.subr.mxu0 0.0
    %274 = vmatpush1.xpose.msra.mxu0 0.0
    %275 = vmatprep.subr.mxu0 0.0
    %276 = vmatpush1.xpose.msra.mxu0 0.0
    %277 = vmatprep.subr.mxu0 0.0
    %278 = vmatpush1.xpose.msra.mxu0 0.0
    %279 = vmatprep.subr.mxu0 0.0
    %280 = vmatpush1.xpose.msra.mxu0 0.0
    %281 = vmatprep.subr.mxu0 0.0
    %282 = vmatpush1.xpose.msra.mxu0 0.0
    %283 = vmatprep.subr.mxu0 0.0
    %284 = vmatpush1.xpose.msra.mxu0 0.0
    %285 = vmatprep.subr.mxu0 0.0
    %286 = vmatpush1.xpose.msra.mxu0 0.0
    %287 = vmatprep.subr.mxu0 0.0
    %288 = vmatpush1.xpose.msra.mxu0 0.0
    %289 = vmatprep.subr.mxu0 0.0
    %290 = vmatpush1.xpose.msra.mxu0 0.0
    %291 = vmatprep.subr.mxu0 0.0
    %292 = vmatpush1.xpose.msra.mxu0 0.0
    %293 = vmatprep.subr.mxu0 0.0
    %294 = vmatpush1.xpose.msra.mxu0 0.0
    %295 = vmatprep.subr.mxu0 0.0
    %296 = vmatpush1.xpose.msra.mxu0 0.0
    %297 = vmatprep.subr.mxu0 0.0
    %298 = vmatpush1.xpose.msra.mxu0 0.0
    %299 = vmatprep.subr.mxu0 0.0
    %300 = vmatpush1.xpose.msra.mxu0 0.0
    %301 = vmatprep.subr.mxu0 0.0
    %302 = vmatpush1.xpose.msra.mxu0 0.0
    %303 = vmatprep.subr.mxu0 0.0
    %304 = vmatpush1.xpose.msra.mxu0 0.0
    %305 = vmatprep.subr.mxu0 0.0
    %306 = vmatpush1.xpose.msra.mxu0 0.0
    %307 = vmatprep.subr.mxu0 0.0
    %308 = vmatpush1.xpose.msra.mxu0 0.0
    %309 = vmatprep.subr.mxu0 0.0
    %310 = vmatpush1.xpose.msra.mxu0 0.0
    %311 = vmatprep.subr.mxu0 0.0
    %312 = vmatpush1.xpose.msra.mxu0 0.0
    %313 = vmatprep.subr.mxu0 0.0
    %314 = vmatpush1.xpose.msra.mxu0 0.0
    %315 = vmatprep.subr.mxu0 0.0
    %316 = vmatpush1.xpose.msra.mxu0 0.0
    %317 = vmatprep.subr.mxu0 0.0
    %318 = vmatpush1.xpose.msra.mxu0 0.0
    %319 = vmatprep.subr.mxu0 0.0
    %320 = vmatpush1.xpose.msra.mxu0 0.0
    %321 = vmatprep.subr.mxu0 0.0
    %322 = vmatpush1.xpose.msra.mxu0 0.0
    %323 = vmatprep.subr.mxu0 0.0
    %324 = vmatpush1.xpose.msra.mxu0 0.0
    %325 = vmatprep.subr.mxu0 0.0
    %326 = vmatpush1.xpose.msra.mxu0 0.0
    %327 = vmatprep.subr.mxu0 0.0
    %328 = vmatpush1.xpose.msra.mxu0 0.0
    %329 = vmatprep.subr.mxu0 0.0
    %330 = vmatpush1.xpose.msra.mxu0 0.0
    %331 = vmatprep.subr.mxu0 0.0
    %332 = vmatpush1.xpose.msra.mxu0 0.0
    %333 = vmatprep.mubr.f32.mxu0 0.0
    %v334 = vand.u32 %v37, 4294901760
    %v335 = vsub.f32 %v37, %v334
    %v336 = vand.u32 %v335, 4294901760
    %337 = vmatmul.mubr.f32.gmra.mrb[0].mxu0 %v336
    %v338 = vpop.f32.mrb[0].mxu0
    %v339 = vadd.f32 %v265, %v338
    %v340 = vpop.f32.mrb[0].mxu0
    %341 = vdwg.mxu0
    %342 = vmatprep.subr.mxu0 0.0
    %v343 = vand.u32 %v40, 4294901760
    %v344 = vsub.f32 %v40, %v343
    %v345 = vand.u32 %v344, 4294901760
    %346 = vmatpush1.xpose.msra.mxu0 %v345
    %347 = vmatprep.subr.mxu0 0.0
    %348 = vmatpush1.xpose.msra.mxu0 0.0
    %349 = vmatprep.subr.mxu0 0.0
    %350 = vmatpush1.xpose.msra.mxu0 0.0
    %351 = vmatprep.subr.mxu0 0.0
    %352 = vmatpush1.xpose.msra.mxu0 0.0
    %353 = vmatprep.subr.mxu0 0.0
    %354 = vmatpush1.xpose.msra.mxu0 0.0
    %355 = vmatprep.subr.mxu0 0.0
    %356 = vmatpush1.xpose.msra.mxu0 0.0
    %357 = vmatprep.subr.mxu0 0.0
    %358 = vmatpush1.xpose.msra.mxu0 0.0
    %359 = vmatprep.subr.mxu0 0.0
    %360 = vmatpush1.xpose.msra.mxu0 0.0
    %361 = vmatprep.subr.mxu0 0.0
    %362 = vmatpush1.xpose.msra.mxu0 0.0
    %363 = vmatprep.subr.mxu0 0.0
    %364 = vmatpush1.xpose.msra.mxu0 0.0
    %365 = vmatprep.subr.mxu0 0.0
    %366 = vmatpush1.xpose.msra.mxu0 0.0
    %367 = vmatprep.subr.mxu0 0.0
    %368 = vmatpush1.xpose.msra.mxu0 0.0
    %369 = vmatprep.subr.mxu0 0.0
    %370 = vmatpush1.xpose.msra.mxu0 0.0
    %371 = vmatprep.subr.mxu0 0.0
    %372 = vmatpush1.xpose.msra.mxu0 0.0
    %373 = vmatprep.subr.mxu0 0.0
    %374 = vmatpush1.xpose.msra.mxu0 0.0
    %375 = vmatprep.subr.mxu0 0.0
    %376 = vmatpush1.xpose.msra.mxu0 0.0
    %377 = vmatprep.subr.mxu0 0.0
    %378 = vmatpush1.xpose.msra.mxu0 0.0
    %379 = vmatprep.subr.mxu0 0.0
    %380 = vmatpush1.xpose.msra.mxu0 0.0
    %381 = vmatprep.subr.mxu0 0.0
    %382 = vmatpush1.xpose.msra.mxu0 0.0
    %383 = vmatprep.subr.mxu0 0.0
    %384 = vmatpush1.xpose.msra.mxu0 0.0
    %385 = vmatprep.subr.mxu0 0.0
    %386 = vmatpush1.xpose.msra.mxu0 0.0
    %387 = vmatprep.subr.mxu0 0.0
    %388 = vmatpush1.xpose.msra.mxu0 0.0
    %389 = vmatprep.subr.mxu0 0.0
    %390 = vmatpush1.xpose.msra.mxu0 0.0
    %391 = vmatprep.subr.mxu0 0.0
    %392 = vmatpush1.xpose.msra.mxu0 0.0
    %393 = vmatprep.subr.mxu0 0.0
    %394 = vmatpush1.xpose.msra.mxu0 0.0
    %395 = vmatprep.subr.mxu0 0.0
    %396 = vmatpush1.xpose.msra.mxu0 0.0
    %397 = vmatprep.subr.mxu0 0.0
    %398 = vmatpush1.xpose.msra.mxu0 0.0
    %399 = vmatprep.subr.mxu0 0.0
    %400 = vmatpush1.xpose.msra.mxu0 0.0
    %401 = vmatprep.subr.mxu0 0.0
    %402 = vmatpush1.xpose.msra.mxu0 0.0
    %403 = vmatprep.subr.mxu0 0.0
    %404 = vmatpush1.xpose.msra.mxu0 0.0
    %405 = vmatprep.subr.mxu0 0.0
    %406 = vmatpush1.xpose.msra.mxu0 0.0
    %407 = vmatprep.subr.mxu0 0.0
    %408 = vmatpush1.xpose.msra.mxu0 0.0
    %409 = vmatprep.mubr.f32.mxu0 0.0
    %v410 = vand.u32 %v37, 4294901760
    %411 = vmatmul.mubr.f32.gmra.mrb[0].mxu0 %v410
    %v412 = vpop.f32.mrb[0].mxu0
    %v413 = vadd.f32 %v339, %v412
    %v414 = vpop.f32.mrb[0].mxu0
    %415 = vdwg.mxu0
    %416 = vmatprep.subr.mxu0 0.0
    %v417 = vand.u32 %v40, 4294901760
    %418 = vmatpush1.xpose.msra.mxu0 %v417
    %419 = vmatprep.subr.mxu0 0.0
    %420 = vmatpush1.xpose.msra.mxu0 0.0
    %421 = vmatprep.subr.mxu0 0.0
    %422 = vmatpush1.xpose.msra.mxu0 0.0
    %423 = vmatprep.subr.mxu0 0.0
    %424 = vmatpush1.xpose.msra.mxu0 0.0
    %425 = vmatprep.subr.mxu0 0.0
    %426 = vmatpush1.xpose.msra.mxu0 0.0
    %427 = vmatprep.subr.mxu0 0.0
    %428 = vmatpush1.xpose.msra.mxu0 0.0
    %429 = vmatprep.subr.mxu0 0.0
    %430 = vmatpush1.xpose.msra.mxu0 0.0
    %431 = vmatprep.subr.mxu0 0.0
    %432 = vmatpush1.xpose.msra.mxu0 0.0
    %433 = vmatprep.subr.mxu0 0.0
    %434 = vmatpush1.xpose.msra.mxu0 0.0
    %435 = vmatprep.subr.mxu0 0.0
    %436 = vmatpush1.xpose.msra.mxu0 0.0
    %437 = vmatprep.subr.mxu0 0.0
    %438 = vmatpush1.xpose.msra.mxu0 0.0
    %439 = vmatprep.subr.mxu0 0.0
    %440 = vmatpush1.xpose.msra.mxu0 0.0
    %441 = vmatprep.subr.mxu0 0.0
    %442 = vmatpush1.xpose.msra.mxu0 0.0
    %443 = vmatprep.subr.mxu0 0.0
    %444 = vmatpush1.xpose.msra.mxu0 0.0
    %445 = vmatprep.subr.mxu0 0.0
    %446 = vmatpush1.xpose.msra.mxu0 0.0
    %447 = vmatprep.subr.mxu0 0.0
    %448 = vmatpush1.xpose.msra.mxu0 0.0
    %449 = vmatprep.subr.mxu0 0.0
    %450 = vmatpush1.xpose.msra.mxu0 0.0
    %451 = vmatprep.subr.mxu0 0.0
    %452 = vmatpush1.xpose.msra.mxu0 0.0
    %453 = vmatprep.subr.mxu0 0.0
    %454 = vmatpush1.xpose.msra.mxu0 0.0
    %455 = vmatprep.subr.mxu0 0.0
    %456 = vmatpush1.xpose.msra.mxu0 0.0
    %457 = vmatprep.subr.mxu0 0.0
    %458 = vmatpush1.xpose.msra.mxu0 0.0
    %459 = vmatprep.subr.mxu0 0.0
    %460 = vmatpush1.xpose.msra.mxu0 0.0
    %461 = vmatprep.subr.mxu0 0.0
    %462 = vmatpush1.xpose.msra.mxu0 0.0
    %463 = vmatprep.subr.mxu0 0.0
    %464 = vmatpush1.xpose.msra.mxu0 0.0
    %465 = vmatprep.subr.mxu0 0.0
    %466 = vmatpush1.xpose.msra.mxu0 0.0
    %467 = vmatprep.subr.mxu0 0.0
    %468 = vmatpush1.xpose.msra.mxu0 0.0
    %469 = vmatprep.subr.mxu0 0.0
    %470 = vmatpush1.xpose.msra.mxu0 0.0
    %471 = vmatprep.subr.mxu0 0.0
    %472 = vmatpush1.xpose.msra.mxu0 0.0
    %473 = vmatprep.subr.mxu0 0.0
    %474 = vmatpush1.xpose.msra.mxu0 0.0
    %475 = vmatprep.subr.mxu0 0.0
    %476 = vmatpush1.xpose.msra.mxu0 0.0
    %477 = vmatprep.subr.mxu0 0.0
    %478 = vmatpush1.xpose.msra.mxu0 0.0
    %479 = vmatprep.subr.mxu0 0.0
    %480 = vmatpush1.xpose.msra.mxu0 0.0
    %481 = vmatprep.mubr.f32.mxu0 0.0
    %v482 = vand.u32 %v37, 4294901760
    %483 = vmatmul.mubr.f32.gmra.mrb[0].mxu0 %v482
    %v484 = vpop.f32.mrb[0].mxu0
    %v485 = vadd.f32 %v413, %v484
    %v486 = vpop.f32.mrb[0].mxu0
    %487 = vdwg.mxu0
    %v489 = vsel %vm35, %v30, 0
    %v492 = vsel %vm35, %v32, 0
    %494 = vmatprep.subr.mxu0 0.0
    %v495 = vand.u32 %v492, 4294901760
    %496 = vmatpush1.xpose.msra.mxu0 %v495
    %497 = vmatprep.subr.mxu0 0.0
    %498 = vmatpush1.xpose.msra.mxu0 0.0
    %499 = vmatprep.subr.mxu0 0.0
    %500 = vmatpush1.xpose.msra.mxu0 0.0
    %501 = vmatprep.subr.mxu0 0.0
    %502 = vmatpush1.xpose.msra.mxu0 0.0
    %503 = vmatprep.subr.mxu0 0.0
    %504 = vmatpush1.xpose.msra.mxu0 0.0
    %505 = vmatprep.subr.mxu0 0.0
    %506 = vmatpush1.xpose.msra.mxu0 0.0
    %507 = vmatprep.subr.mxu0 0.0
    %508 = vmatpush1.xpose.msra.mxu0 0.0
    %509 = vmatprep.subr.mxu0 0.0
    %510 = vmatpush1.xpose.msra.mxu0 0.0
    %511 = vmatprep.subr.mxu0 0.0
    %512 = vmatpush1.xpose.msra.mxu0 0.0
    %513 = vmatprep.subr.mxu0 0.0
    %514 = vmatpush1.xpose.msra.mxu0 0.0
    %515 = vmatprep.subr.mxu0 0.0
    %516 = vmatpush1.xpose.msra.mxu0 0.0
    %517 = vmatprep.subr.mxu0 0.0
    %518 = vmatpush1.xpose.msra.mxu0 0.0
    %519 = vmatprep.subr.mxu0 0.0
    %520 = vmatpush1.xpose.msra.mxu0 0.0
    %521 = vmatprep.subr.mxu0 0.0
    %522 = vmatpush1.xpose.msra.mxu0 0.0
    %523 = vmatprep.subr.mxu0 0.0
    %524 = vmatpush1.xpose.msra.mxu0 0.0
    %525 = vmatprep.subr.mxu0 0.0
    %526 = vmatpush1.xpose.msra.mxu0 0.0
    %527 = vmatprep.subr.mxu0 0.0
    %528 = vmatpush1.xpose.msra.mxu0 0.0
    %529 = vmatprep.subr.mxu0 0.0
    %530 = vmatpush1.xpose.msra.mxu0 0.0
    %531 = vmatprep.subr.mxu0 0.0
    %532 = vmatpush1.xpose.msra.mxu0 0.0
    %533 = vmatprep.subr.mxu0 0.0
    %534 = vmatpush1.xpose.msra.mxu0 0.0
    %535 = vmatprep.subr.mxu0 0.0
    %536 = vmatpush1.xpose.msra.mxu0 0.0
    %537 = vmatprep.subr.mxu0 0.0
    %538 = vmatpush1.xpose.msra.mxu0 0.0
    %539 = vmatprep.subr.mxu0 0.0
    %540 = vmatpush1.xpose.msra.mxu0 0.0
    %541 = vmatprep.subr.mxu0 0.0
    %542 = vmatpush1.xpose.msra.mxu0 0.0
    %543 = vmatprep.subr.mxu0 0.0
    %544 = vmatpush1.xpose.msra.mxu0 0.0
    %545 = vmatprep.subr.mxu0 0.0
    %546 = vmatpush1.xpose.msra.mxu0 0.0
    %547 = vmatprep.subr.mxu0 0.0
    %548 = vmatpush1.xpose.msra.mxu0 0.0
    %549 = vmatprep.subr.mxu0 0.0
    %550 = vmatpush1.xpose.msra.mxu0 0.0
    %551 = vmatprep.subr.mxu0 0.0
    %552 = vmatpush1.xpose.msra.mxu0 0.0
    %553 = vmatprep.subr.mxu0 0.0
    %554 = vmatpush1.xpose.msra.mxu0 0.0
    %555 = vmatprep.subr.mxu0 0.0
    %556 = vmatpush1.xpose.msra.mxu0 0.0
    %557 = vmatprep.subr.mxu0 0.0
    %558 = vmatpush1.xpose.msra.mxu0 0.0
    %559 = vmatprep.mubr.f32.mxu0 0.0
    %v560 = vand.u32 %v489, 4294901760
    %v561 = vsub.f32 %v489, %v560
    %v562 = vand.u32 %v561, 4294901760
    %v563 = vsub.f32 %v561, %v562
    %v564 = vand.u32 %v563, 4294901760
    %565 = vmatmul.mubr.f32.gmra.mrb[0].mxu0 %v564
    %v566 = vpop.f32.mrb[0].mxu0
    %v567 = vadd.f32 0.0, %v566
    %v568 = vpop.f32.mrb[0].mxu0
    %569 = vdwg.mxu0
    %570 = vmatprep.subr.mxu0 0.0
    %v571 = vand.u32 %v492, 4294901760
    %v572 = vsub.f32 %v492, %v571
    %v573 = vand.u32 %v572, 4294901760
    %v574 = vsub.f32 %v572, %v573
    %v575 = vand.u32 %v574, 4294901760
    %576 = vmatpush1.xpose.msra.mxu0 %v575
    %577 = vmatprep.subr.mxu0 0.0
    %578 = vmatpush1.xpose.msra.mxu0 0.0
    %579 = vmatprep.subr.mxu0 0.0
    %580 = vmatpush1.xpose.msra.mxu0 0.0
    %581 = vmatprep.subr.mxu0 0.0
    %582 = vmatpush1.xpose.msra.mxu0 0.0
    %583 = vmatprep.subr.mxu0 0.0
    %584 = vmatpush1.xpose.msra.mxu0 0.0
    %585 = vmatprep.subr.mxu0 0.0
    %586 = vmatpush1.xpose.msra.mxu0 0.0
    %587 = vmatprep.subr.mxu0 0.0
    %588 = vmatpush1.xpose.msra.mxu0 0.0
    %589 = vmatprep.subr.mxu0 0.0
    %590 = vmatpush1.xpose.msra.mxu0 0.0
    %591 = vmatprep.subr.mxu0 0.0
    %592 = vmatpush1.xpose.msra.mxu0 0.0
    %593 = vmatprep.subr.mxu0 0.0
    %594 = vmatpush1.xpose.msra.mxu0 0.0
    %595 = vmatprep.subr.mxu0 0.0
    %596 = vmatpush1.xpose.msra.mxu0 0.0
    %597 = vmatprep.subr.mxu0 0.0
    %598 = vmatpush1.xpose.msra.mxu0 0.0
    %599 = vmatprep.subr.mxu0 0.0
    %600 = vmatpush1.xpose.msra.mxu0 0.0
    %601 = vmatprep.subr.mxu0 0.0
    %602 = vmatpush1.xpose.msra.mxu0 0.0
    %603 = vmatprep.subr.mxu0 0.0
    %604 = vmatpush1.xpose.msra.mxu0 0.0
    %605 = vmatprep.subr.mxu0 0.0
    %606 = vmatpush1.xpose.msra.mxu0 0.0
    %607 = vmatprep.subr.mxu0 0.0
    %608 = vmatpush1.xpose.msra.mxu0 0.0
    %609 = vmatprep.subr.mxu0 0.0
    %610 = vmatpush1.xpose.msra.mxu0 0.0
    %611 = vmatprep.subr.mxu0 0.0
    %612 = vmatpush1.xpose.msra.mxu0 0.0
    %613 = vmatprep.subr.mxu0 0.0
    %614 = vmatpush1.xpose.msra.mxu0 0.0
    %615 = vmatprep.subr.mxu0 0.0
    %616 = vmatpush1.xpose.msra.mxu0 0.0
    %617 = vmatprep.subr.mxu0 0.0
    %618 = vmatpush1.xpose.msra.mxu0 0.0
    %619 = vmatprep.subr.mxu0 0.0
    %620 = vmatpush1.xpose.msra.mxu0 0.0
    %621 = vmatprep.subr.mxu0 0.0
    %622 = vmatpush1.xpose.msra.mxu0 0.0
    %623 = vmatprep.subr.mxu0 0.0
    %624 = vmatpush1.xpose.msra.mxu0 0.0
    %625 = vmatprep.subr.mxu0 0.0
    %626 = vmatpush1.xpose.msra.mxu0 0.0
    %627 = vmatprep.subr.mxu0 0.0
    %628 = vmatpush1.xpose.msra.mxu0 0.0
    %629 = vmatprep.subr.mxu0 0.0
    %630 = vmatpush1.xpose.msra.mxu0 0.0
    %631 = vmatprep.subr.mxu0 0.0
    %632 = vmatpush1.xpose.msra.mxu0 0.0
    %633 = vmatprep.subr.mxu0 0.0
    %634 = vmatpush1.xpose.msra.mxu0 0.0
    %635 = vmatprep.subr.mxu0 0.0
    %636 = vmatpush1.xpose.msra.mxu0 0.0
    %637 = vmatprep.subr.mxu0 0.0
    %638 = vmatpush1.xpose.msra.mxu0 0.0
    %639 = vmatprep.mubr.f32.mxu0 0.0
    %v640 = vand.u32 %v489, 4294901760
    %641 = vmatmul.mubr.f32.gmra.mrb[0].mxu0 %v640
    %v642 = vpop.f32.mrb[0].mxu0
    %v643 = vadd.f32 %v567, %v642
    %v644 = vpop.f32.mrb[0].mxu0
    %645 = vdwg.mxu0
    %646 = vmatprep.subr.mxu0 0.0
    %v647 = vand.u32 %v492, 4294901760
    %v648 = vsub.f32 %v492, %v647
    %649 = vmatpush1.xpose.msra.mxu0 %v648
    %650 = vmatprep.subr.mxu0 0.0
    %651 = vmatpush1.xpose.msra.mxu0 0.0
    %652 = vmatprep.subr.mxu0 0.0
    %653 = vmatpush1.xpose.msra.mxu0 0.0
    %654 = vmatprep.subr.mxu0 0.0
    %655 = vmatpush1.xpose.msra.mxu0 0.0
    %656 = vmatprep.subr.mxu0 0.0
    %657 = vmatpush1.xpose.msra.mxu0 0.0
    %658 = vmatprep.subr.mxu0 0.0
    %659 = vmatpush1.xpose.msra.mxu0 0.0
    %660 = vmatprep.subr.mxu0 0.0
    %661 = vmatpush1.xpose.msra.mxu0 0.0
    %662 = vmatprep.subr.mxu0 0.0
    %663 = vmatpush1.xpose.msra.mxu0 0.0
    %664 = vmatprep.subr.mxu0 0.0
    %665 = vmatpush1.xpose.msra.mxu0 0.0
    %666 = vmatprep.subr.mxu0 0.0
    %667 = vmatpush1.xpose.msra.mxu0 0.0
    %668 = vmatprep.subr.mxu0 0.0
    %669 = vmatpush1.xpose.msra.mxu0 0.0
    %670 = vmatprep.subr.mxu0 0.0
    %671 = vmatpush1.xpose.msra.mxu0 0.0
    %672 = vmatprep.subr.mxu0 0.0
    %673 = vmatpush1.xpose.msra.mxu0 0.0
    %674 = vmatprep.subr.mxu0 0.0
    %675 = vmatpush1.xpose.msra.mxu0 0.0
    %676 = vmatprep.subr.mxu0 0.0
    %677 = vmatpush1.xpose.msra.mxu0 0.0
    %678 = vmatprep.subr.mxu0 0.0
    %679 = vmatpush1.xpose.msra.mxu0 0.0
    %680 = vmatprep.subr.mxu0 0.0
    %681 = vmatpush1.xpose.msra.mxu0 0.0
    %682 = vmatprep.subr.mxu0 0.0
    %683 = vmatpush1.xpose.msra.mxu0 0.0
    %684 = vmatprep.subr.mxu0 0.0
    %685 = vmatpush1.xpose.msra.mxu0 0.0
    %686 = vmatprep.subr.mxu0 0.0
    %687 = vmatpush1.xpose.msra.mxu0 0.0
    %688 = vmatprep.subr.mxu0 0.0
    %689 = vmatpush1.xpose.msra.mxu0 0.0
    %690 = vmatprep.subr.mxu0 0.0
    %691 = vmatpush1.xpose.msra.mxu0 0.0
    %692 = vmatprep.subr.mxu0 0.0
    %693 = vmatpush1.xpose.msra.mxu0 0.0
    %694 = vmatprep.subr.mxu0 0.0
    %695 = vmatpush1.xpose.msra.mxu0 0.0
    %696 = vmatprep.subr.mxu0 0.0
    %697 = vmatpush1.xpose.msra.mxu0 0.0
    %698 = vmatprep.subr.mxu0 0.0
    %699 = vmatpush1.xpose.msra.mxu0 0.0
    %700 = vmatprep.subr.mxu0 0.0
    %701 = vmatpush1.xpose.msra.mxu0 0.0
    %702 = vmatprep.subr.mxu0 0.0
    %703 = vmatpush1.xpose.msra.mxu0 0.0
    %704 = vmatprep.subr.mxu0 0.0
    %705 = vmatpush1.xpose.msra.mxu0 0.0
    %706 = vmatprep.subr.mxu0 0.0
    %707 = vmatpush1.xpose.msra.mxu0 0.0
    %708 = vmatprep.subr.mxu0 0.0
    %709 = vmatpush1.xpose.msra.mxu0 0.0
    %710 = vmatprep.subr.mxu0 0.0
    %711 = vmatpush1.xpose.msra.mxu0 0.0
    %712 = vmatprep.mubr.f32.mxu0 0.0
    %v713 = vand.u32 %v489, 4294901760
    %v714 = vsub.f32 %v489, %v713
    %715 = vmatmul.mubr.f32.gmra.mrb[0].mxu0 %v714
    %v716 = vpop.f32.mrb[0].mxu0
    %v717 = vadd.f32 %v643, %v716
    %v718 = vpop.f32.mrb[0].mxu0
    %719 = vdwg.mxu0
    %720 = vmatprep.subr.mxu0 0.0
    %v721 = vand.u32 %v492, 4294901760
    %722 = vmatpush1.xpose.msra.mxu0 %v721
    %723 = vmatprep.subr.mxu0 0.0
    %724 = vmatpush1.xpose.msra.mxu0 0.0
    %725 = vmatprep.subr.mxu0 0.0
    %726 = vmatpush1.xpose.msra.mxu0 0.0
    %727 = vmatprep.subr.mxu0 0.0
    %728 = vmatpush1.xpose.msra.mxu0 0.0
    %729 = vmatprep.subr.mxu0 0.0
    %730 = vmatpush1.xpose.msra.mxu0 0.0
    %731 = vmatprep.subr.mxu0 0.0
    %732 = vmatpush1.xpose.msra.mxu0 0.0
    %733 = vmatprep.subr.mxu0 0.0
    %734 = vmatpush1.xpose.msra.mxu0 0.0
    %735 = vmatprep.subr.mxu0 0.0
    %736 = vmatpush1.xpose.msra.mxu0 0.0
    %737 = vmatprep.subr.mxu0 0.0
    %738 = vmatpush1.xpose.msra.mxu0 0.0
    %739 = vmatprep.subr.mxu0 0.0
    %740 = vmatpush1.xpose.msra.mxu0 0.0
    %741 = vmatprep.subr.mxu0 0.0
    %742 = vmatpush1.xpose.msra.mxu0 0.0
    %743 = vmatprep.subr.mxu0 0.0
    %744 = vmatpush1.xpose.msra.mxu0 0.0
    %745 = vmatprep.subr.mxu0 0.0
    %746 = vmatpush1.xpose.msra.mxu0 0.0
    %747 = vmatprep.subr.mxu0 0.0
    %748 = vmatpush1.xpose.msra.mxu0 0.0
    %749 = vmatprep.subr.mxu0 0.0
    %750 = vmatpush1.xpose.msra.mxu0 0.0
    %751 = vmatprep.subr.mxu0 0.0
    %752 = vmatpush1.xpose.msra.mxu0 0.0
    %753 = vmatprep.subr.mxu0 0.0
    %754 = vmatpush1.xpose.msra.mxu0 0.0
    %755 = vmatprep.subr.mxu0 0.0
    %756 = vmatpush1.xpose.msra.mxu0 0.0
    %757 = vmatprep.subr.mxu0 0.0
    %758 = vmatpush1.xpose.msra.mxu0 0.0
    %759 = vmatprep.subr.mxu0 0.0
    %760 = vmatpush1.xpose.msra.mxu0 0.0
    %761 = vmatprep.subr.mxu0 0.0
    %762 = vmatpush1.xpose.msra.mxu0 0.0
    %763 = vmatprep.subr.mxu0 0.0
    %764 = vmatpush1.xpose.msra.mxu0 0.0
    %765 = vmatprep.subr.mxu0 0.0
    %766 = vmatpush1.xpose.msra.mxu0 0.0
    %767 = vmatprep.subr.mxu0 0.0
    %768 = vmatpush1.xpose.msra.mxu0 0.0
    %769 = vmatprep.subr.mxu0 0.0
    %770 = vmatpush1.xpose.msra.mxu0 0.0
    %771 = vmatprep.subr.mxu0 0.0
    %772 = vmatpush1.xpose.msra.mxu0 0.0
    %773 = vmatprep.subr.mxu0 0.0
    %774 = vmatpush1.xpose.msra.mxu0 0.0
    %775 = vmatprep.subr.mxu0 0.0
    %776 = vmatpush1.xpose.msra.mxu0 0.0
    %777 = vmatprep.subr.mxu0 0.0
    %778 = vmatpush1.xpose.msra.mxu0 0.0
    %779 = vmatprep.subr.mxu0 0.0
    %780 = vmatpush1.xpose.msra.mxu0 0.0
    %781 = vmatprep.subr.mxu0 0.0
    %782 = vmatpush1.xpose.msra.mxu0 0.0
    %783 = vmatprep.subr.mxu0 0.0
    %784 = vmatpush1.xpose.msra.mxu0 0.0
    %785 = vmatprep.mubr.f32.mxu0 0.0
    %v786 = vand.u32 %v489, 4294901760
    %v787 = vsub.f32 %v489, %v786
    %v788 = vand.u32 %v787, 4294901760
    %789 = vmatmul.mubr.f32.gmra.mrb[0].mxu0 %v788
    %v790 = vpop.f32.mrb[0].mxu0
    %v791 = vadd.f32 %v717, %v790
    %v792 = vpop.f32.mrb[0].mxu0
    %793 = vdwg.mxu0
    %794 = vmatprep.subr.mxu0 0.0
    %v795 = vand.u32 %v492, 4294901760
    %v796 = vsub.f32 %v492, %v795
    %v797 = vand.u32 %v796, 4294901760
    %798 = vmatpush1.xpose.msra.mxu0 %v797
    %799 = vmatprep.subr.mxu0 0.0
    %800 = vmatpush1.xpose.msra.mxu0 0.0
    %801 = vmatprep.subr.mxu0 0.0
    %802 = vmatpush1.xpose.msra.mxu0 0.0
    %803 = vmatprep.subr.mxu0 0.0
    %804 = vmatpush1.xpose.msra.mxu0 0.0
    %805 = vmatprep.subr.mxu0 0.0
    %806 = vmatpush1.xpose.msra.mxu0 0.0
    %807 = vmatprep.subr.mxu0 0.0
    %808 = vmatpush1.xpose.msra.mxu0 0.0
    %809 = vmatprep.subr.mxu0 0.0
    %810 = vmatpush1.xpose.msra.mxu0 0.0
    %811 = vmatprep.subr.mxu0 0.0
    %812 = vmatpush1.xpose.msra.mxu0 0.0
    %813 = vmatprep.subr.mxu0 0.0
    %814 = vmatpush1.xpose.msra.mxu0 0.0
    %815 = vmatprep.subr.mxu0 0.0
    %816 = vmatpush1.xpose.msra.mxu0 0.0
    %817 = vmatprep.subr.mxu0 0.0
    %818 = vmatpush1.xpose.msra.mxu0 0.0
    %819 = vmatprep.subr.mxu0 0.0
    %820 = vmatpush1.xpose.msra.mxu0 0.0
    %821 = vmatprep.subr.mxu0 0.0
    %822 = vmatpush1.xpose.msra.mxu0 0.0
    %823 = vmatprep.subr.mxu0 0.0
    %824 = vmatpush1.xpose.msra.mxu0 0.0
    %825 = vmatprep.subr.mxu0 0.0
    %826 = vmatpush1.xpose.msra.mxu0 0.0
    %827 = vmatprep.subr.mxu0 0.0
    %828 = vmatpush1.xpose.msra.mxu0 0.0
    %829 = vmatprep.subr.mxu0 0.0
    %830 = vmatpush1.xpose.msra.mxu0 0.0
    %831 = vmatprep.subr.mxu0 0.0
    %832 = vmatpush1.xpose.msra.mxu0 0.0
    %833 = vmatprep.subr.mxu0 0.0
    %834 = vmatpush1.xpose.msra.mxu0 0.0
    %835 = vmatprep.subr.mxu0 0.0
    %836 = vmatpush1.xpose.msra.mxu0 0.0
    %837 = vmatprep.subr.mxu0 0.0
    %838 = vmatpush1.xpose.msra.mxu0 0.0
    %839 = vmatprep.subr.mxu0 0.0
    %840 = vmatpush1.xpose.msra.mxu0 0.0
    %841 = vmatprep.subr.mxu0 0.0
    %842 = vmatpush1.xpose.msra.mxu0 0.0
    %843 = vmatprep.subr.mxu0 0.0
    %844 = vmatpush1.xpose.msra.mxu0 0.0
    %845 = vmatprep.subr.mxu0 0.0
    %846 = vmatpush1.xpose.msra.mxu0 0.0
    %847 = vmatprep.subr.mxu0 0.0
    %848 = vmatpush1.xpose.msra.mxu0 0.0
    %849 = vmatprep.subr.mxu0 0.0
    %850 = vmatpush1.xpose.msra.mxu0 0.0
    %851 = vmatprep.subr.mxu0 0.0
    %852 = vmatpush1.xpose.msra.mxu0 0.0
    %853 = vmatprep.subr.mxu0 0.0
    %854 = vmatpush1.xpose.msra.mxu0 0.0
    %855 = vmatprep.subr.mxu0 0.0
    %856 = vmatpush1.xpose.msra.mxu0 0.0
    %857 = vmatprep.subr.mxu0 0.0
    %858 = vmatpush1.xpose.msra.mxu0 0.0
    %859 = vmatprep.subr.mxu0 0.0
    %860 = vmatpush1.xpose.msra.mxu0 0.0
    %861 = vmatprep.mubr.f32.mxu0 0.0
    %v862 = vand.u32 %v489, 4294901760
    %863 = vmatmul.mubr.f32.gmra.mrb[0].mxu0 %v862
    %v864 = vpop.f32.mrb[0].mxu0
    %v865 = vadd.f32 %v791, %v864
    %v866 = vpop.f32.mrb[0].mxu0
    %867 = vdwg.mxu0
    %868 = vmatprep.subr.mxu0 0.0
    %v869 = vand.u32 %v492, 4294901760
    %870 = vmatpush1.xpose.msra.mxu0 %v869
    %871 = vmatprep.subr.mxu0 0.0
    %872 = vmatpush1.xpose.msra.mxu0 0.0
    %873 = vmatprep.subr.mxu0 0.0
    %874 = vmatpush1.xpose.msra.mxu0 0.0
    %875 = vmatprep.subr.mxu0 0.0
    %876 = vmatpush1.xpose.msra.mxu0 0.0
    %877 = vmatprep.subr.mxu0 0.0
    %878 = vmatpush1.xpose.msra.mxu0 0.0
    %879 = vmatprep.subr.mxu0 0.0
    %880 = vmatpush1.xpose.msra.mxu0 0.0
    %881 = vmatprep.subr.mxu0 0.0
    %882 = vmatpush1.xpose.msra.mxu0 0.0
    %883 = vmatprep.subr.mxu0 0.0
    %884 = vmatpush1.xpose.msra.mxu0 0.0
    %885 = vmatprep.subr.mxu0 0.0
    %886 = vmatpush1.xpose.msra.mxu0 0.0
    %887 = vmatprep.subr.mxu0 0.0
    %888 = vmatpush1.xpose.msra.mxu0 0.0
    %889 = vmatprep.subr.mxu0 0.0
    %890 = vmatpush1.xpose.msra.mxu0 0.0
    %891 = vmatprep.subr.mxu0 0.0
    %892 = vmatpush1.xpose.msra.mxu0 0.0
    %893 = vmatprep.subr.mxu0 0.0
    %894 = vmatpush1.xpose.msra.mxu0 0.0
    %895 = vmatprep.subr.mxu0 0.0
    %896 = vmatpush1.xpose.msra.mxu0 0.0
    %897 = vmatprep.subr.mxu0 0.0
    %898 = vmatpush1.xpose.msra.mxu0 0.0
    %899 = vmatprep.subr.mxu0 0.0
    %900 = vmatpush1.xpose.msra.mxu0 0.0
    %901 = vmatprep.subr.mxu0 0.0
    %902 = vmatpush1.xpose.msra.mxu0 0.0
    %903 = vmatprep.subr.mxu0 0.0
    %904 = vmatpush1.xpose.msra.mxu0 0.0
    %905 = vmatprep.subr.mxu0 0.0
    %906 = vmatpush1.xpose.msra.mxu0 0.0
    %907 = vmatprep.subr.mxu0 0.0
    %908 = vmatpush1.xpose.msra.mxu0 0.0
    %909 = vmatprep.subr.mxu0 0.0
    %910 = vmatpush1.xpose.msra.mxu0 0.0
    %911 = vmatprep.subr.mxu0 0.0
    %912 = vmatpush1.xpose.msra.mxu0 0.0
    %913 = vmatprep.subr.mxu0 0.0
    %914 = vmatpush1.xpose.msra.mxu0 0.0
    %915 = vmatprep.subr.mxu0 0.0
    %916 = vmatpush1.xpose.msra.mxu0 0.0
    %917 = vmatprep.subr.mxu0 0.0
    %918 = vmatpush1.xpose.msra.mxu0 0.0
    %919 = vmatprep.subr.mxu0 0.0
    %920 = vmatpush1.xpose.msra.mxu0 0.0
    %921 = vmatprep.subr.mxu0 0.0
    %922 = vmatpush1.xpose.msra.mxu0 0.0
    %923 = vmatprep.subr.mxu0 0.0
    %924 = vmatpush1.xpose.msra.mxu0 0.0
    %925 = vmatprep.subr.mxu0 0.0
    %926 = vmatpush1.xpose.msra.mxu0 0.0
    %927 = vmatprep.subr.mxu0 0.0
    %928 = vmatpush1.xpose.msra.mxu0 0.0
    %929 = vmatprep.subr.mxu0 0.0
    %930 = vmatpush1.xpose.msra.mxu0 0.0
    %931 = vmatprep.subr.mxu0 0.0
    %932 = vmatpush1.xpose.msra.mxu0 0.0
    %933 = vmatprep.mubr.f32.mxu0 0.0
    %v934 = vand.u32 %v489, 4294901760
    %935 = vmatmul.mubr.f32.gmra.mrb[0].mxu0 %v934
    %v936 = vpop.f32.mrb[0].mxu0
    %v937 = vadd.f32 %v865, %v936
    %v938 = vpop.f32.mrb[0].mxu0
    %939 = vdwg.mxu0
    %v940 = vmul.f32 %v485, 0.17677669
    %v941 = vmul.f32 %v937, 0.17677669
    %vm942 = vcmp.eq.f32.partialorder %v33, 0.0
    %vm943 = vcmp.eq.f32.partialorder %v34, 0.0
    %v944 = vsel %vm942, 1, 0
    %v945 = vsel %vm943, 1, 0
    %946 = vset.pattern.permute.xlu0 0
    %947 = vperm.xlu0 %946, %v944
    %v948 = vpop.permute.xlu0 %947
    %949 = vset.pattern.permute.xlu0 0
    %950 = vperm.xlu0 %949, %v945
    %v951 = vpop.permute.xlu0 %950
    %vm952 = vcmp.eq.s32.totalorder %v948, 1
    %vm953 = vcmp.eq.s32.totalorder %v951, 1
    %v954 = vsel %vm952, -1e+09, %v940
    %v955 = vsel %vm953, -1e+09, %v941
    %956 = vxpose.xlu0.b32.start [1/16] %v954, 128
    %957 = vxpose.xlu0.b32.cont [2/16] 0.0, 128
    %958 = vxpose.xlu0.b32.cont [3/16] 0.0, 128
    %959 = vxpose.xlu0.b32.cont [4/16] 0.0, 128
    %960 = vxpose.xlu0.b32.cont [5/16] 0.0, 128
    %961 = vxpose.xlu0.b32.cont [6/16] 0.0, 128
    %962 = vxpose.xlu0.b32.cont [7/16] 0.0, 128
    %963 = vxpose.xlu0.b32.cont [8/16] 0.0, 128
    %964 = vxpose.xlu0.b32.cont [9/16] 0.0, 128
    %965 = vxpose.xlu0.b32.cont [10/16] 0.0, 128
    %966 = vxpose.xlu0.b32.cont [11/16] 0.0, 128
    %967 = vxpose.xlu0.b32.cont [12/16] 0.0, 128
    %968 = vxpose.xlu0.b32.cont [13/16] 0.0, 128
    %969 = vxpose.xlu0.b32.cont [14/16] 0.0, 128
    %970 = vxpose.xlu0.b32.cont [15/16] 0.0, 128
    %971 = vxpose.xlu0.b32.end [16/16] 0.0, 128
    %v972 = vpop.trf.xlu0
    %v973 = vpop.trf.xlu0
    %v974 = vpop.trf.xlu0
    %v975 = vpop.trf.xlu0
    %v976 = vpop.trf.xlu0
    %v977 = vpop.trf.xlu0
    %v978 = vpop.trf.xlu0
    %v979 = vpop.trf.xlu0
    %v980 = vpop.trf.xlu0
    %v981 = vpop.trf.xlu0
    %v982 = vpop.trf.xlu0
    %v983 = vpop.trf.xlu0
    %v984 = vpop.trf.xlu0
    %v985 = vpop.trf.xlu0
    %v986 = vpop.trf.xlu0
    %v987 = vpop.trf.xlu0
    %988 = vxpose.xlu0.b32.start [1/16] %v955, 128
    %989 = vxpose.xlu0.b32.cont [2/16] 0.0, 128
    %990 = vxpose.xlu0.b32.cont [3/16] 0.0, 128
    %991 = vxpose.xlu0.b32.cont [4/16] 0.0, 128
    %992 = vxpose.xlu0.b32.cont [5/16] 0.0, 128
    %993 = vxpose.xlu0.b32.cont [6/16] 0.0, 128
    %994 = vxpose.xlu0.b32.cont [7/16] 0.0, 128
    %995 = vxpose.xlu0.b32.cont [8/16] 0.0, 128
    %996 = vxpose.xlu0.b32.cont [9/16] 0.0, 128
    %997 = vxpose.xlu0.b32.cont [10/16] 0.0, 128
    %998 = vxpose.xlu0.b32.cont [11/16] 0.0, 128
    %999 = vxpose.xlu0.b32.cont [12/16] 0.0, 128
    %1000 = vxpose.xlu0.b32.cont [13/16] 0.0, 128
    %1001 = vxpose.xlu0.b32.cont [14/16] 0.0, 128
    %1002 = vxpose.xlu0.b32.cont [15/16] 0.0, 128
    %1003 = vxpose.xlu0.b32.end [16/16] 0.0, 128
    %v1004 = vpop.trf.xlu0
    %v1005 = vpop.trf.xlu0
    %v1006 = vpop.trf.xlu0
    %v1007 = vpop.trf.xlu0
    %v1008 = vpop.trf.xlu0
    %v1009 = vpop.trf.xlu0
    %v1010 = vpop.trf.xlu0
    %v1011 = vpop.trf.xlu0
    %v1012 = vpop.trf.xlu0
    %v1013 = vpop.trf.xlu0
    %v1014 = vpop.trf.xlu0
    %v1015 = vpop.trf.xlu0
    %v1016 = vpop.trf.xlu0
    %v1017 = vpop.trf.xlu0
    %v1018 = vpop.trf.xlu0
    %v1019 = vpop.trf.xlu0
    %vm1020 = vcmask 60416
    %v1021 = vsel %vm1020, %v972, -inf
    %1022 = vmax.xlane.f32.xlu0 %v1021
    %v1023 = vpop.xlane.xlu0 %1022
    %v1024 = vsel %vm1020, %v1004, -inf
    %1025 = vmax.xlane.f32.xlu0 %v1024
    %v1026 = vpop.xlane.xlu0 %1025
    %v1027 = vsub.f32 %v972, %v1023
    %v1028 = vsub.f32 %v1004, %v1026
    %v1029 = vmul.f32 %v1027, 1.442695
    %v1030 = vpow.pop %v1029
    %v1031 = vmul.f32 %v1028, 1.442695
    %v1032 = vpow.pop %v1031
    %v1033 = vsel %vm1020, %v1030, 0.0
    %1034 = vadd.xlane.f32.xlu0 %v1033
    %v1035 = vpop.xlane.xlu0 %1034
    %v1036 = vsel %vm1020, %v1032, 0.0
    %1037 = vadd.xlane.f32.xlu0 %v1036
    %v1038 = vpop.xlane.xlu0 %1037
    %vm1039 = vcmask 64512
    %v1041 = vsel %vm1039, %v1030, 0
    %1043 = vmatprep.subr.mxu0 0.0
    %v1044 = vand.u32 %v29, 4294901760
    %1045 = vmatpush1.msra.mxu0 %v1044
    %1046 = vmatprep.subr.mxu0 0.0
    %1047 = vmatpush1.msra.mxu0 0.0
    %1048 = vmatprep.subr.mxu0 0.0
    %1049 = vmatpush1.msra.mxu0 0.0
    %1050 = vmatprep.subr.mxu0 0.0
    %1051 = vmatpush1.msra.mxu0 0.0
    %1052 = vmatprep.subr.mxu0 0.0
    %1053 = vmatpush1.msra.mxu0 0.0
    %1054 = vmatprep.subr.mxu0 0.0
    %1055 = vmatpush1.msra.mxu0 0.0
    %1056 = vmatprep.subr.mxu0 0.0
    %1057 = vmatpush1.msra.mxu0 0.0
    %1058 = vmatprep.subr.mxu0 0.0
    %1059 = vmatpush1.msra.mxu0 0.0
    %1060 = vmatprep.subr.mxu0 0.0
    %1061 = vmatpush1.msra.mxu0 0.0
    %1062 = vmatprep.subr.mxu0 0.0
    %1063 = vmatpush1.msra.mxu0 0.0
    %1064 = vmatprep.subr.mxu0 0.0
    %1065 = vmatpush1.msra.mxu0 0.0
    %1066 = vmatprep.subr.mxu0 0.0
    %1067 = vmatpush1.msra.mxu0 0.0
    %1068 = vmatprep.subr.mxu0 0.0
    %1069 = vmatpush1.msra.mxu0 0.0
    %1070 = vmatprep.subr.mxu0 0.0
    %1071 = vmatpush1.msra.mxu0 0.0
    %1072 = vmatprep.subr.mxu0 0.0
    %1073 = vmatpush1.msra.mxu0 0.0
    %1074 = vmatprep.subr.mxu0 0.0
    %1075 = vmatpush1.msra.mxu0 0.0
    %1076 = vmatprep.subr.mxu0 0.0
    %1077 = vmatpush1.msra.mxu0 0.0
    %1078 = vmatprep.subr.mxu0 0.0
    %1079 = vmatpush1.msra.mxu0 0.0
    %1080 = vmatprep.subr.mxu0 0.0
    %1081 = vmatpush1.msra.mxu0 0.0
    %1082 = vmatprep.subr.mxu0 0.0
    %1083 = vmatpush1.msra.mxu0 0.0
    %1084 = vmatprep.subr.mxu0 0.0
    %1085 = vmatpush1.msra.mxu0 0.0
    %1086 = vmatprep.subr.mxu0 0.0
    %1087 = vmatpush1.msra.mxu0 0.0
    %1088 = vmatprep.subr.mxu0 0.0
    %1089 = vmatpush1.msra.mxu0 0.0
    %1090 = vmatprep.subr.mxu0 0.0
    %1091 = vmatpush1.msra.mxu0 0.0
    %1092 = vmatprep.subr.mxu0 0.0
    %1093 = vmatpush1.msra.mxu0 0.0
    %1094 = vmatprep.subr.mxu0 0.0
    %1095 = vmatpush1.msra.mxu0 0.0
    %1096 = vmatprep.subr.mxu0 0.0
    %1097 = vmatpush1.msra.mxu0 0.0
    %1098 = vmatprep.subr.mxu0 0.0
    %1099 = vmatpush1.msra.mxu0 0.0
    %1100 = vmatprep.subr.mxu0 0.0
    %1101 = vmatpush1.msra.mxu0 0.0
    %1102 = vmatprep.subr.mxu0 0.0
    %1103 = vmatpush1.msra.mxu0 0.0
    %1104 = vmatprep.subr.mxu0 0.0
    %1105 = vmatpush1.msra.mxu0 0.0
    %1106 = vmatprep.subr.mxu0 0.0
    %1107 = vmatpush1.msra.mxu0 0.0
    %1108 = vmatprep.mubr.f32.mxu0 0.0
    %v1109 = vand.u32 %v1041, 4294901760
    %v1110 = vsub.f32 %v1041, %v1109
    %v1111 = vand.u32 %v1110, 4294901760
    %v1112 = vsub.f32 %v1110, %v1111
    %v1113 = vand.u32 %v1112, 4294901760
    %1114 = vmatmul.mubr.f32.gmra.mrb[0].mxu0 %v1113
    %v1115 = vpop.f32.mrb[0].mxu0
    %v1116 = vadd.f32 0.0, %v1115
    %v1117 = vpop.f32.mrb[0].mxu0
    %1118 = vdwg.mxu0
    %1119 = vmatprep.subr.mxu0 0.0
    %v1120 = vand.u32 %v29, 4294901760
    %v1121 = vsub.f32 %v29, %v1120
    %v1122 = vand.u32 %v1121, 4294901760
    %v1123 = vsub.f32 %v1121, %v1122
    %v1124 = vand.u32 %v1123, 4294901760
    %1125 = vmatpush1.msra.mxu0 %v1124
    %1126 = vmatprep.subr.mxu0 0.0
    %1127 = vmatpush1.msra.mxu0 0.0
    %1128 = vmatprep.subr.mxu0 0.0
    %1129 = vmatpush1.msra.mxu0 0.0
    %1130 = vmatprep.subr.mxu0 0.0
    %1131 = vmatpush1.msra.mxu0 0.0
    %1132 = vmatprep.subr.mxu0 0.0
    %1133 = vmatpush1.msra.mxu0 0.0
    %1134 = vmatprep.subr.mxu0 0.0
    %1135 = vmatpush1.msra.mxu0 0.0
    %1136 = vmatprep.subr.mxu0 0.0
    %1137 = vmatpush1.msra.mxu0 0.0
    %1138 = vmatprep.subr.mxu0 0.0
    %1139 = vmatpush1.msra.mxu0 0.0
    %1140 = vmatprep.subr.mxu0 0.0
    %1141 = vmatpush1.msra.mxu0 0.0
    %1142 = vmatprep.subr.mxu0 0.0
    %1143 = vmatpush1.msra.mxu0 0.0
    %1144 = vmatprep.subr.mxu0 0.0
    %1145 = vmatpush1.msra.mxu0 0.0
    %1146 = vmatprep.subr.mxu0 0.0
    %1147 = vmatpush1.msra.mxu0 0.0
    %1148 = vmatprep.subr.mxu0 0.0
    %1149 = vmatpush1.msra.mxu0 0.0
    %1150 = vmatprep.subr.mxu0 0.0
    %1151 = vmatpush1.msra.mxu0 0.0
    %1152 = vmatprep.subr.mxu0 0.0
    %1153 = vmatpush1.msra.mxu0 0.0
    %1154 = vmatprep.subr.mxu0 0.0
    %1155 = vmatpush1.msra.mxu0 0.0
    %1156 = vmatprep.subr.mxu0 0.0
    %1157 = vmatpush1.msra.mxu0 0.0
    %1158 = vmatprep.subr.mxu0 0.0
    %1159 = vmatpush1.msra.mxu0 0.0
    %1160 = vmatprep.subr.mxu0 0.0
    %1161 = vmatpush1.msra.mxu0 0.0
    %1162 = vmatprep.subr.mxu0 0.0
    %1163 = vmatpush1.msra.mxu0 0.0
    %1164 = vmatprep.subr.mxu0 0.0
    %1165 = vmatpush1.msra.mxu0 0.0
    %1166 = vmatprep.subr.mxu0 0.0
    %1167 = vmatpush1.msra.mxu0 0.0
    %1168 = vmatprep.subr.mxu0 0.0
    %1169 = vmatpush1.msra.mxu0 0.0
    %1170 = vmatprep.subr.mxu0 0.0
    %1171 = vmatpush1.msra.mxu0 0.0
    %1172 = vmatprep.subr.mxu0 0.0
    %1173 = vmatpush1.msra.mxu0 0.0
    %1174 = vmatprep.subr.mxu0 0.0
    %1175 = vmatpush1.msra.mxu0 0.0
    %1176 = vmatprep.subr.mxu0 0.0
    %1177 = vmatpush1.msra.mxu0 0.0
    %1178 = vmatprep.subr.mxu0 0.0
    %1179 = vmatpush1.msra.mxu0 0.0
    %1180 = vmatprep.subr.mxu0 0.0
    %1181 = vmatpush1.msra.mxu0 0.0
    %1182 = vmatprep.subr.mxu0 0.0
    %1183 = vmatpush1.msra.mxu0 0.0
    %1184 = vmatprep.subr.mxu0 0.0
    %1185 = vmatpush1.msra.mxu0 0.0
    %1186 = vmatprep.subr.mxu0 0.0
    %1187 = vmatpush1.msra.mxu0 0.0
    %1188 = vmatprep.mubr.f32.mxu0 0.0
    %v1189 = vand.u32 %v1041, 4294901760
    %1190 = vmatmul.mubr.f32.gmra.mrb[0].mxu0 %v1189
    %v1191 = vpop.f32.mrb[0].mxu0
    %v1192 = vadd.f32 %v1116, %v1191
    %v1193 = vpop.f32.mrb[0].mxu0
    %1194 = vdwg.mxu0
    %1195 = vmatprep.subr.mxu0 0.0
    %v1196 = vand.u32 %v29, 4294901760
    %v1197 = vsub.f32 %v29, %v1196
    %1198 = vmatpush1.msra.mxu0 %v1197
    %1199 = vmatprep.subr.mxu0 0.0
    %1200 = vmatpush1.msra.mxu0 0.0
    %1201 = vmatprep.subr.mxu0 0.0
    %1202 = vmatpush1.msra.mxu0 0.0
    %1203 = vmatprep.subr.mxu0 0.0
    %1204 = vmatpush1.msra.mxu0 0.0
    %1205 = vmatprep.subr.mxu0 0.0
    %1206 = vmatpush1.msra.mxu0 0.0
    %1207 = vmatprep.subr.mxu0 0.0
    %1208 = vmatpush1.msra.mxu0 0.0
    %1209 = vmatprep.subr.mxu0 0.0
    %1210 = vmatpush1.msra.mxu0 0.0
    %1211 = vmatprep.subr.mxu0 0.0
    %1212 = vmatpush1.msra.mxu0 0.0
    %1213 = vmatprep.subr.mxu0 0.0
    %1214 = vmatpush1.msra.mxu0 0.0
    %1215 = vmatprep.subr.mxu0 0.0
    %1216 = vmatpush1.msra.mxu0 0.0
    %1217 = vmatprep.subr.mxu0 0.0
    %1218 = vmatpush1.msra.mxu0 0.0
    %1219 = vmatprep.subr.mxu0 0.0
    %1220 = vmatpush1.msra.mxu0 0.0
    %1221 = vmatprep.subr.mxu0 0.0
    %1222 = vmatpush1.msra.mxu0 0.0
    %1223 = vmatprep.subr.mxu0 0.0
    %1224 = vmatpush1.msra.mxu0 0.0
    %1225 = vmatprep.subr.mxu0 0.0
    %1226 = vmatpush1.msra.mxu0 0.0
    %1227 = vmatprep.subr.mxu0 0.0
    %1228 = vmatpush1.msra.mxu0 0.0
    %1229 = vmatprep.subr.mxu0 0.0
    %1230 = vmatpush1.msra.mxu0 0.0
    %1231 = vmatprep.subr.mxu0 0.0
    %1232 = vmatpush1.msra.mxu0 0.0
    %1233 = vmatprep.subr.mxu0 0.0
    %1234 = vmatpush1.msra.mxu0 0.0
    %1235 = vmatprep.subr.mxu0 0.0
    %1236 = vmatpush1.msra.mxu0 0.0
    %1237 = vmatprep.subr.mxu0 0.0
    %1238 = vmatpush1.msra.mxu0 0.0
    %1239 = vmatprep.subr.mxu0 0.0
    %1240 = vmatpush1.msra.mxu0 0.0
    %1241 = vmatprep.subr.mxu0 0.0
    %1242 = vmatpush1.msra.mxu0 0.0
    %1243 = vmatprep.subr.mxu0 0.0
    %1244 = vmatpush1.msra.mxu0 0.0
    %1245 = vmatprep.subr.mxu0 0.0
    %1246 = vmatpush1.msra.mxu0 0.0
    %1247 = vmatprep.subr.mxu0 0.0
    %1248 = vmatpush1.msra.mxu0 0.0
    %1249 = vmatprep.subr.mxu0 0.0
    %1250 = vmatpush1.msra.mxu0 0.0
    %1251 = vmatprep.subr.mxu0 0.0
    %1252 = vmatpush1.msra.mxu0 0.0
    %1253 = vmatprep.subr.mxu0 0.0
    %1254 = vmatpush1.msra.mxu0 0.0
    %1255 = vmatprep.subr.mxu0 0.0
    %1256 = vmatpush1.msra.mxu0 0.0
    %1257 = vmatprep.subr.mxu0 0.0
    %1258 = vmatpush1.msra.mxu0 0.0
    %1259 = vmatprep.subr.mxu0 0.0
    %1260 = vmatpush1.msra.mxu0 0.0
    %1261 = vmatprep.mubr.f32.mxu0 0.0
    %v1262 = vand.u32 %v1041, 4294901760
    %v1263 = vsub.f32 %v1041, %v1262
    %1264 = vmatmul.mubr.f32.gmra.mrb[0].mxu0 %v1263
    %v1265 = vpop.f32.mrb[0].mxu0
    %v1266 = vadd.f32 %v1192, %v1265
    %v1267 = vpop.f32.mrb[0].mxu0
    %1268 = vdwg.mxu0
    %1269 = vmatprep.subr.mxu0 0.0
    %v1270 = vand.u32 %v29, 4294901760
    %1271 = vmatpush1.msra.mxu0 %v1270
    %1272 = vmatprep.subr.mxu0 0.0
    %1273 = vmatpush1.msra.mxu0 0.0
    %1274 = vmatprep.subr.mxu0 0.0
    %1275 = vmatpush1.msra.mxu0 0.0
    %1276 = vmatprep.subr.mxu0 0.0
    %1277 = vmatpush1.msra.mxu0 0.0
    %1278 = vmatprep.subr.mxu0 0.0
    %1279 = vmatpush1.msra.mxu0 0.0
    %1280 = vmatprep.subr.mxu0 0.0
    %1281 = vmatpush1.msra.mxu0 0.0
    %1282 = vmatprep.subr.mxu0 0.0
    %1283 = vmatpush1.msra.mxu0 0.0
    %1284 = vmatprep.subr.mxu0 0.0
    %1285 = vmatpush1.msra.mxu0 0.0
    %1286 = vmatprep.subr.mxu0 0.0
    %1287 = vmatpush1.msra.mxu0 0.0
    %1288 = vmatprep.subr.mxu0 0.0
    %1289 = vmatpush1.msra.mxu0 0.0
    %1290 = vmatprep.subr.mxu0 0.0
    %1291 = vmatpush1.msra.mxu0 0.0
    %1292 = vmatprep.subr.mxu0 0.0
    %1293 = vmatpush1.msra.mxu0 0.0
    %1294 = vmatprep.subr.mxu0 0.0
    %1295 = vmatpush1.msra.mxu0 0.0
    %1296 = vmatprep.subr.mxu0 0.0
    %1297 = vmatpush1.msra.mxu0 0.0
    %1298 = vmatprep.subr.mxu0 0.0
    %1299 = vmatpush1.msra.mxu0 0.0
    %1300 = vmatprep.subr.mxu0 0.0
    %1301 = vmatpush1.msra.mxu0 0.0
    %1302 = vmatprep.subr.mxu0 0.0
    %1303 = vmatpush1.msra.mxu0 0.0
    %1304 = vmatprep.subr.mxu0 0.0
    %1305 = vmatpush1.msra.mxu0 0.0
    %1306 = vmatprep.subr.mxu0 0.0
    %1307 = vmatpush1.msra.mxu0 0.0
    %1308 = vmatprep.subr.mxu0 0.0
    %1309 = vmatpush1.msra.mxu0 0.0
    %1310 = vmatprep.subr.mxu0 0.0
    %1311 = vmatpush1.msra.mxu0 0.0
    %1312 = vmatprep.subr.mxu0 0.0
    %1313 = vmatpush1.msra.mxu0 0.0
    %1314 = vmatprep.subr.mxu0 0.0
    %1315 = vmatpush1.msra.mxu0 0.0
    %1316 = vmatprep.subr.mxu0 0.0
    %1317 = vmatpush1.msra.mxu0 0.0
    %1318 = vmatprep.subr.mxu0 0.0
    %1319 = vmatpush1.msra.mxu0 0.0
    %1320 = vmatprep.subr.mxu0 0.0
    %1321 = vmatpush1.msra.mxu0 0.0
    %1322 = vmatprep.subr.mxu0 0.0
    %1323 = vmatpush1.msra.mxu0 0.0
    %1324 = vmatprep.subr.mxu0 0.0
    %1325 = vmatpush1.msra.mxu0 0.0
    %1326 = vmatprep.subr.mxu0 0.0
    %1327 = vmatpush1.msra.mxu0 0.0
    %1328 = vmatprep.subr.mxu0 0.0
    %1329 = vmatpush1.msra.mxu0 0.0
    %1330 = vmatprep.subr.mxu0 0.0
    %1331 = vmatpush1.msra.mxu0 0.0
    %1332 = vmatprep.subr.mxu0 0.0
    %1333 = vmatpush1.msra.mxu0 0.0
    %1334 = vmatprep.mubr.f32.mxu0 0.0
    %v1335 = vand.u32 %v1041, 4294901760
    %v1336 = vsub.f32 %v1041, %v1335
    %v1337 = vand.u32 %v1336, 4294901760
    %1338 = vmatmul.mubr.f32.gmra.mrb[0].mxu0 %v1337
    %v1339 = vpop.f32.mrb[0].mxu0
    %v1340 = vadd.f32 %v1266, %v1339
    %v1341 = vpop.f32.mrb[0].mxu0
    %1342 = vdwg.mxu0
    %1343 = vmatprep.subr.mxu0 0.0
    %v1344 = vand.u32 %v29, 4294901760
    %v1345 = vsub.f32 %v29, %v1344
    %v1346 = vand.u32 %v1345, 4294901760
    %1347 = vmatpush1.msra.mxu0 %v1346
    %1348 = vmatprep.subr.mxu0 0.0
    %1349 = vmatpush1.msra.mxu0 0.0
    %1350 = vmatprep.subr.mxu0 0.0
    %1351 = vmatpush1.msra.mxu0 0.0
    %1352 = vmatprep.subr.mxu0 0.0
    %1353 = vmatpush1.msra.mxu0 0.0
    %1354 = vmatprep.subr.mxu0 0.0
    %1355 = vmatpush1.msra.mxu0 0.0
    %1356 = vmatprep.subr.mxu0 0.0
    %1357 = vmatpush1.msra.mxu0 0.0
    %1358 = vmatprep.subr.mxu0 0.0
    %1359 = vmatpush1.msra.mxu0 0.0
    %1360 = vmatprep.subr.mxu0 0.0
    %1361 = vmatpush1.msra.mxu0 0.0
    %1362 = vmatprep.subr.mxu0 0.0
    %1363 = vmatpush1.msra.mxu0 0.0
    %1364 = vmatprep.subr.mxu0 0.0
    %1365 = vmatpush1.msra.mxu0 0.0
    %1366 = vmatprep.subr.mxu0 0.0
    %1367 = vmatpush1.msra.mxu0 0.0
    %1368 = vmatprep.subr.mxu0 0.0
    %1369 = vmatpush1.msra.mxu0 0.0
    %1370 = vmatprep.subr.mxu0 0.0
    %1371 = vmatpush1.msra.mxu0 0.0
    %1372 = vmatprep.subr.mxu0 0.0
    %1373 = vmatpush1.msra.mxu0 0.0
    %1374 = vmatprep.subr.mxu0 0.0
    %1375 = vmatpush1.msra.mxu0 0.0
    %1376 = vmatprep.subr.mxu0 0.0
    %1377 = vmatpush1.msra.mxu0 0.0
    %1378 = vmatprep.subr.mxu0 0.0
    %1379 = vmatpush1.msra.mxu0 0.0
    %1380 = vmatprep.subr.mxu0 0.0
    %1381 = vmatpush1.msra.mxu0 0.0
    %1382 = vmatprep.subr.mxu0 0.0
    %1383 = vmatpush1.msra.mxu0 0.0
    %1384 = vmatprep.subr.mxu0 0.0
    %1385 = vmatpush1.msra.mxu0 0.0
    %1386 = vmatprep.subr.mxu0 0.0
    %1387 = vmatpush1.msra.mxu0 0.0
    %1388 = vmatprep.subr.mxu0 0.0
    %1389 = vmatpush1.msra.mxu0 0.0
    %1390 = vmatprep.subr.mxu0 0.0
    %1391 = vmatpush1.msra.mxu0 0.0
    %1392 = vmatprep.subr.mxu0 0.0
    %1393 = vmatpush1.msra.mxu0 0.0
    %1394 = vmatprep.subr.mxu0 0.0
    %1395 = vmatpush1.msra.mxu0 0.0
    %1396 = vmatprep.subr.mxu0 0.0
    %1397 = vmatpush1.msra.mxu0 0.0
    %1398 = vmatprep.subr.mxu0 0.0
    %1399 = vmatpush1.msra.mxu0 0.0
    %1400 = vmatprep.subr.mxu0 0.0
    %1401 = vmatpush1.msra.mxu0 0.0
    %1402 = vmatprep.subr.mxu0 0.0
    %1403 = vmatpush1.msra.mxu0 0.0
    %1404 = vmatprep.subr.mxu0 0.0
    %1405 = vmatpush1.msra.mxu0 0.0
    %1406 = vmatprep.subr.mxu0 0.0
    %1407 = vmatpush1.msra.mxu0 0.0
    %1408 = vmatprep.subr.mxu0 0.0
    %1409 = vmatpush1.msra.mxu0 0.0
    %1410 = vmatprep.mubr.f32.mxu0 0.0
    %v1411 = vand.u32 %v1041, 4294901760
    %1412 = vmatmul.mubr.f32.gmra.mrb[0].mxu0 %v1411
    %v1413 = vpop.f32.mrb[0].mxu0
    %v1414 = vadd.f32 %v1340, %v1413
    %v1415 = vpop.f32.mrb[0].mxu0
    %1416 = vdwg.mxu0
    %1417 = vmatprep.subr.mxu0 0.0
    %v1418 = vand.u32 %v29, 4294901760
    %1419 = vmatpush1.msra.mxu0 %v1418
    %1420 = vmatprep.subr.mxu0 0.0
    %1421 = vmatpush1.msra.mxu0 0.0
    %1422 = vmatprep.subr.mxu0 0.0
    %1423 = vmatpush1.msra.mxu0 0.0
    %1424 = vmatprep.subr.mxu0 0.0
    %1425 = vmatpush1.msra.mxu0 0.0
    %1426 = vmatprep.subr.mxu0 0.0
    %1427 = vmatpush1.msra.mxu0 0.0
    %1428 = vmatprep.subr.mxu0 0.0
    %1429 = vmatpush1.msra.mxu0 0.0
    %1430 = vmatprep.subr.mxu0 0.0
    %1431 = vmatpush1.msra.mxu0 0.0
    %1432 = vmatprep.subr.mxu0 0.0
    %1433 = vmatpush1.msra.mxu0 0.0
    %1434 = vmatprep.subr.mxu0 0.0
    %1435 = vmatpush1.msra.mxu0 0.0
    %1436 = vmatprep.subr.mxu0 0.0
    %1437 = vmatpush1.msra.mxu0 0.0
    %1438 = vmatprep.subr.mxu0 0.0
    %1439 = vmatpush1.msra.mxu0 0.0
    %1440 = vmatprep.subr.mxu0 0.0
    %1441 = vmatpush1.msra.mxu0 0.0
    %1442 = vmatprep.subr.mxu0 0.0
    %1443 = vmatpush1.msra.mxu0 0.0
    %1444 = vmatprep.subr.mxu0 0.0
    %1445 = vmatpush1.msra.mxu0 0.0
    %1446 = vmatprep.subr.mxu0 0.0
    %1447 = vmatpush1.msra.mxu0 0.0
    %1448 = vmatprep.subr.mxu0 0.0
    %1449 = vmatpush1.msra.mxu0 0.0
    %1450 = vmatprep.subr.mxu0 0.0
    %1451 = vmatpush1.msra.mxu0 0.0
    %1452 = vmatprep.subr.mxu0 0.0
    %1453 = vmatpush1.msra.mxu0 0.0
    %1454 = vmatprep.subr.mxu0 0.0
    %1455 = vmatpush1.msra.mxu0 0.0
    %1456 = vmatprep.subr.mxu0 0.0
    %1457 = vmatpush1.msra.mxu0 0.0
    %1458 = vmatprep.subr.mxu0 0.0
    %1459 = vmatpush1.msra.mxu0 0.0
    %1460 = vmatprep.subr.mxu0 0.0
    %1461 = vmatpush1.msra.mxu0 0.0
    %1462 = vmatprep.subr.mxu0 0.0
    %1463 = vmatpush1.msra.mxu0 0.0
    %1464 = vmatprep.subr.mxu0 0.0
    %1465 = vmatpush1.msra.mxu0 0.0
    %1466 = vmatprep.subr.mxu0 0.0
    %1467 = vmatpush1.msra.mxu0 0.0
    %1468 = vmatprep.subr.mxu0 0.0
    %1469 = vmatpush1.msra.mxu0 0.0
    %1470 = vmatprep.subr.mxu0 0.0
    %1471 = vmatpush1.msra.mxu0 0.0
    %1472 = vmatprep.subr.mxu0 0.0
    %1473 = vmatpush1.msra.mxu0 0.0
    %1474 = vmatprep.subr.mxu0 0.0
    %1475 = vmatpush1.msra.mxu0 0.0
    %1476 = vmatprep.subr.mxu0 0.0
    %1477 = vmatpush1.msra.mxu0 0.0
    %1478 = vmatprep.subr.mxu0 0.0
    %1479 = vmatpush1.msra.mxu0 0.0
    %1480 = vmatprep.subr.mxu0 0.0
    %1481 = vmatpush1.msra.mxu0 0.0
    %1482 = vmatprep.mubr.f32.mxu0 0.0
    %v1483 = vand.u32 %v1041, 4294901760
    %1484 = vmatmul.mubr.f32.gmra.mrb[0].mxu0 %v1483
    %v1485 = vpop.f32.mrb[0].mxu0
    %v1486 = vadd.f32 %v1414, %v1485
    %v1487 = vpop.f32.mrb[0].mxu0
    %1488 = vdwg.mxu0
    %v1490 = vsel %vm1039, %v1032, 0
    %1492 = vmatprep.subr.mxu0 0.0
    %v1493 = vand.u32 %v30, 4294901760
    %1494 = vmatpush1.msra.mxu0 %v1493
    %1495 = vmatprep.subr.mxu0 0.0
    %1496 = vmatpush1.msra.mxu0 0.0
    %1497 = vmatprep.subr.mxu0 0.0
    %1498 = vmatpush1.msra.mxu0 0.0
    %1499 = vmatprep.subr.mxu0 0.0
    %1500 = vmatpush1.msra.mxu0 0.0
    %1501 = vmatprep.subr.mxu0 0.0
    %1502 = vmatpush1.msra.mxu0 0.0
    %1503 = vmatprep.subr.mxu0 0.0
    %1504 = vmatpush1.msra.mxu0 0.0
    %1505 = vmatprep.subr.mxu0 0.0
    %1506 = vmatpush1.msra.mxu0 0.0
    %1507 = vmatprep.subr.mxu0 0.0
    %1508 = vmatpush1.msra.mxu0 0.0
    %1509 = vmatprep.subr.mxu0 0.0
    %1510 = vmatpush1.msra.mxu0 0.0
    %1511 = vmatprep.subr.mxu0 0.0
    %1512 = vmatpush1.msra.mxu0 0.0
    %1513 = vmatprep.subr.mxu0 0.0
    %1514 = vmatpush1.msra.mxu0 0.0
    %1515 = vmatprep.subr.mxu0 0.0
    %1516 = vmatpush1.msra.mxu0 0.0
    %1517 = vmatprep.subr.mxu0 0.0
    %1518 = vmatpush1.msra.mxu0 0.0
    %1519 = vmatprep.subr.mxu0 0.0
    %1520 = vmatpush1.msra.mxu0 0.0
    %1521 = vmatprep.subr.mxu0 0.0
    %1522 = vmatpush1.msra.mxu0 0.0
    %1523 = vmatprep.subr.mxu0 0.0
    %1524 = vmatpush1.msra.mxu0 0.0
    %1525 = vmatprep.subr.mxu0 0.0
    %1526 = vmatpush1.msra.mxu0 0.0
    %1527 = vmatprep.subr.mxu0 0.0
    %1528 = vmatpush1.msra.mxu0 0.0
    %1529 = vmatprep.subr.mxu0 0.0
    %1530 = vmatpush1.msra.mxu0 0.0
    %1531 = vmatprep.subr.mxu0 0.0
    %1532 = vmatpush1.msra.mxu0 0.0
    %1533 = vmatprep.subr.mxu0 0.0
    %1534 = vmatpush1.msra.mxu0 0.0
    %1535 = vmatprep.subr.mxu0 0.0
    %1536 = vmatpush1.msra.mxu0 0.0
    %1537 = vmatprep.subr.mxu0 0.0
    %1538 = vmatpush1.msra.mxu0 0.0
    %1539 = vmatprep.subr.mxu0 0.0
    %1540 = vmatpush1.msra.mxu0 0.0
    %1541 = vmatprep.subr.mxu0 0.0
    %1542 = vmatpush1.msra.mxu0 0.0
    %1543 = vmatprep.subr.mxu0 0.0
    %1544 = vmatpush1.msra.mxu0 0.0
    %1545 = vmatprep.subr.mxu0 0.0
    %1546 = vmatpush1.msra.mxu0 0.0
    %1547 = vmatprep.subr.mxu0 0.0
    %1548 = vmatpush1.msra.mxu0 0.0
    %1549 = vmatprep.subr.mxu0 0.0
    %1550 = vmatpush1.msra.mxu0 0.0
    %1551 = vmatprep.subr.mxu0 0.0
    %1552 = vmatpush1.msra.mxu0 0.0
    %1553 = vmatprep.subr.mxu0 0.0
    %1554 = vmatpush1.msra.mxu0 0.0
    %1555 = vmatprep.subr.mxu0 0.0
    %1556 = vmatpush1.msra.mxu0 0.0
    %1557 = vmatprep.mubr.f32.mxu0 0.0
    %v1558 = vand.u32 %v1490, 4294901760
    %v1559 = vsub.f32 %v1490, %v1558
    %v1560 = vand.u32 %v1559, 4294901760
    %v1561 = vsub.f32 %v1559, %v1560
    %v1562 = vand.u32 %v1561, 4294901760
    %1563 = vmatmul.mubr.f32.gmra.mrb[0].mxu0 %v1562
    %v1564 = vpop.f32.mrb[0].mxu0
    %v1565 = vadd.f32 0.0, %v1564
    %v1566 = vpop.f32.mrb[0].mxu0
    %1567 = vdwg.mxu0
    %1568 = vmatprep.subr.mxu0 0.0
    %v1569 = vand.u32 %v30, 4294901760
    %v1570 = vsub.f32 %v30, %v1569
    %v1571 = vand.u32 %v1570, 4294901760
    %v1572 = vsub.f32 %v1570, %v1571
    %v1573 = vand.u32 %v1572, 4294901760
    %1574 = vmatpush1.msra.mxu0 %v1573
    %1575 = vmatprep.subr.mxu0 0.0
    %1576 = vmatpush1.msra.mxu0 0.0
    %1577 = vmatprep.subr.mxu0 0.0
    %1578 = vmatpush1.msra.mxu0 0.0
    %1579 = vmatprep.subr.mxu0 0.0
    %1580 = vmatpush1.msra.mxu0 0.0
    %1581 = vmatprep.subr.mxu0 0.0
    %1582 = vmatpush1.msra.mxu0 0.0
    %1583 = vmatprep.subr.mxu0 0.0
    %1584 = vmatpush1.msra.mxu0 0.0
    %1585 = vmatprep.subr.mxu0 0.0
    %1586 = vmatpush1.msra.mxu0 0.0
    %1587 = vmatprep.subr.mxu0 0.0
    %1588 = vmatpush1.msra.mxu0 0.0
    %1589 = vmatprep.subr.mxu0 0.0
    %1590 = vmatpush1.msra.mxu0 0.0
    %1591 = vmatprep.subr.mxu0 0.0
    %1592 = vmatpush1.msra.mxu0 0.0
    %1593 = vmatprep.subr.mxu0 0.0
    %1594 = vmatpush1.msra.mxu0 0.0
    %1595 = vmatprep.subr.mxu0 0.0
    %1596 = vmatpush1.msra.mxu0 0.0
    %1597 = vmatprep.subr.mxu0 0.0
    %1598 = vmatpush1.msra.mxu0 0.0
    %1599 = vmatprep.subr.mxu0 0.0
    %1600 = vmatpush1.msra.mxu0 0.0
    %1601 = vmatprep.subr.mxu0 0.0
    %1602 = vmatpush1.msra.mxu0 0.0
    %1603 = vmatprep.subr.mxu0 0.0
    %1604 = vmatpush1.msra.mxu0 0.0
    %1605 = vmatprep.subr.mxu0 0.0
    %1606 = vmatpush1.msra.mxu0 0.0
    %1607 = vmatprep.subr.mxu0 0.0
    %1608 = vmatpush1.msra.mxu0 0.0
    %1609 = vmatprep.subr.mxu0 0.0
    %1610 = vmatpush1.msra.mxu0 0.0
    %1611 = vmatprep.subr.mxu0 0.0
    %1612 = vmatpush1.msra.mxu0 0.0
    %1613 = vmatprep.subr.mxu0 0.0
    %1614 = vmatpush1.msra.mxu0 0.0
    %1615 = vmatprep.subr.mxu0 0.0
    %1616 = vmatpush1.msra.mxu0 0.0
    %1617 = vmatprep.subr.mxu0 0.0
    %1618 = vmatpush1.msra.mxu0 0.0
    %1619 = vmatprep.subr.mxu0 0.0
    %1620 = vmatpush1.msra.mxu0 0.0
    %1621 = vmatprep.subr.mxu0 0.0
    %1622 = vmatpush1.msra.mxu0 0.0
    %1623 = vmatprep.subr.mxu0 0.0
    %1624 = vmatpush1.msra.mxu0 0.0
    %1625 = vmatprep.subr.mxu0 0.0
    %1626 = vmatpush1.msra.mxu0 0.0
    %1627 = vmatprep.subr.mxu0 0.0
    %1628 = vmatpush1.msra.mxu0 0.0
    %1629 = vmatprep.subr.mxu0 0.0
    %1630 = vmatpush1.msra.mxu0 0.0
    %1631 = vmatprep.subr.mxu0 0.0
    %1632 = vmatpush1.msra.mxu0 0.0
    %1633 = vmatprep.subr.mxu0 0.0
    %1634 = vmatpush1.msra.mxu0 0.0
    %1635 = vmatprep.subr.mxu0 0.0
    %1636 = vmatpush1.msra.mxu0 0.0
    %1637 = vmatprep.mubr.f32.mxu0 0.0
    %v1638 = vand.u32 %v1490, 4294901760
    %1639 = vmatmul.mubr.f32.gmra.mrb[0].mxu0 %v1638
    %v1640 = vpop.f32.mrb[0].mxu0
    %v1641 = vadd.f32 %v1565, %v1640
    %v1642 = vpop.f32.mrb[0].mxu0
    %1643 = vdwg.mxu0
    %1644 = vmatprep.subr.mxu0 0.0
    %v1645 = vand.u32 %v30, 4294901760
    %v1646 = vsub.f32 %v30, %v1645
    %1647 = vmatpush1.msra.mxu0 %v1646
    %1648 = vmatprep.subr.mxu0 0.0
    %1649 = vmatpush1.msra.mxu0 0.0
    %1650 = vmatprep.subr.mxu0 0.0
    %1651 = vmatpush1.msra.mxu0 0.0
    %1652 = vmatprep.subr.mxu0 0.0
    %1653 = vmatpush1.msra.mxu0 0.0
    %1654 = vmatprep.subr.mxu0 0.0
    %1655 = vmatpush1.msra.mxu0 0.0
    %1656 = vmatprep.subr.mxu0 0.0
    %1657 = vmatpush1.msra.mxu0 0.0
    %1658 = vmatprep.subr.mxu0 0.0
    %1659 = vmatpush1.msra.mxu0 0.0
    %1660 = vmatprep.subr.mxu0 0.0
    %1661 = vmatpush1.msra.mxu0 0.0
    %1662 = vmatprep.subr.mxu0 0.0
    %1663 = vmatpush1.msra.mxu0 0.0
    %1664 = vmatprep.subr.mxu0 0.0
    %1665 = vmatpush1.msra.mxu0 0.0
    %1666 = vmatprep.subr.mxu0 0.0
    %1667 = vmatpush1.msra.mxu0 0.0
    %1668 = vmatprep.subr.mxu0 0.0
    %1669 = vmatpush1.msra.mxu0 0.0
    %1670 = vmatprep.subr.mxu0 0.0
    %1671 = vmatpush1.msra.mxu0 0.0
    %1672 = vmatprep.subr.mxu0 0.0
    %1673 = vmatpush1.msra.mxu0 0.0
    %1674 = vmatprep.subr.mxu0 0.0
    %1675 = vmatpush1.msra.mxu0 0.0
    %1676 = vmatprep.subr.mxu0 0.0
    %1677 = vmatpush1.msra.mxu0 0.0
    %1678 = vmatprep.subr.mxu0 0.0
    %1679 = vmatpush1.msra.mxu0 0.0
    %1680 = vmatprep.subr.mxu0 0.0
    %1681 = vmatpush1.msra.mxu0 0.0
    %1682 = vmatprep.subr.mxu0 0.0
    %1683 = vmatpush1.msra.mxu0 0.0
    %1684 = vmatprep.subr.mxu0 0.0
    %1685 = vmatpush1.msra.mxu0 0.0
    %1686 = vmatprep.subr.mxu0 0.0
    %1687 = vmatpush1.msra.mxu0 0.0
    %1688 = vmatprep.subr.mxu0 0.0
    %1689 = vmatpush1.msra.mxu0 0.0
    %1690 = vmatprep.subr.mxu0 0.0
    %1691 = vmatpush1.msra.mxu0 0.0
    %1692 = vmatprep.subr.mxu0 0.0
    %1693 = vmatpush1.msra.mxu0 0.0
    %1694 = vmatprep.subr.mxu0 0.0
    %1695 = vmatpush1.msra.mxu0 0.0
    %1696 = vmatprep.subr.mxu0 0.0
    %1697 = vmatpush1.msra.mxu0 0.0
    %1698 = vmatprep.subr.mxu0 0.0
    %1699 = vmatpush1.msra.mxu0 0.0
    %1700 = vmatprep.subr.mxu0 0.0
    %1701 = vmatpush1.msra.mxu0 0.0
    %1702 = vmatprep.subr.mxu0 0.0
    %1703 = vmatpush1.msra.mxu0 0.0
    %1704 = vmatprep.subr.mxu0 0.0
    %1705 = vmatpush1.msra.mxu0 0.0
    %1706 = vmatprep.subr.mxu0 0.0
    %1707 = vmatpush1.msra.mxu0 0.0
    %1708 = vmatprep.subr.mxu0 0.0
    %1709 = vmatpush1.msra.mxu0 0.0
    %1710 = vmatprep.mubr.f32.mxu0 0.0
    %v1711 = vand.u32 %v1490, 4294901760
    %v1712 = vsub.f32 %v1490, %v1711
    %1713 = vmatmul.mubr.f32.gmra.mrb[0].mxu0 %v1712
    %v1714 = vpop.f32.mrb[0].mxu0
    %v1715 = vadd.f32 %v1641, %v1714
    %v1716 = vpop.f32.mrb[0].mxu0
    %1717 = vdwg.mxu0
    %1718 = vmatprep.subr.mxu0 0.0
    %v1719 = vand.u32 %v30, 4294901760
    %1720 = vmatpush1.msra.mxu0 %v1719
    %1721 = vmatprep.subr.mxu0 0.0
    %1722 = vmatpush1.msra.mxu0 0.0
    %1723 = vmatprep.subr.mxu0 0.0
    %1724 = vmatpush1.msra.mxu0 0.0
    %1725 = vmatprep.subr.mxu0 0.0
    %1726 = vmatpush1.msra.mxu0 0.0
    %1727 = vmatprep.subr.mxu0 0.0
    %1728 = vmatpush1.msra.mxu0 0.0
    %1729 = vmatprep.subr.mxu0 0.0
    %1730 = vmatpush1.msra.mxu0 0.0
    %1731 = vmatprep.subr.mxu0 0.0
    %1732 = vmatpush1.msra.mxu0 0.0
    %1733 = vmatprep.subr.mxu0 0.0
    %1734 = vmatpush1.msra.mxu0 0.0
    %1735 = vmatprep.subr.mxu0 0.0
    %1736 = vmatpush1.msra.mxu0 0.0
    %1737 = vmatprep.subr.mxu0 0.0
    %1738 = vmatpush1.msra.mxu0 0.0
    %1739 = vmatprep.subr.mxu0 0.0
    %1740 = vmatpush1.msra.mxu0 0.0
    %1741 = vmatprep.subr.mxu0 0.0
    %1742 = vmatpush1.msra.mxu0 0.0
    %1743 = vmatprep.subr.mxu0 0.0
    %1744 = vmatpush1.msra.mxu0 0.0
    %1745 = vmatprep.subr.mxu0 0.0
    %1746 = vmatpush1.msra.mxu0 0.0
    %1747 = vmatprep.subr.mxu0 0.0
    %1748 = vmatpush1.msra.mxu0 0.0
    %1749 = vmatprep.subr.mxu0 0.0
    %1750 = vmatpush1.msra.mxu0 0.0
    %1751 = vmatprep.subr.mxu0 0.0
    %1752 = vmatpush1.msra.mxu0 0.0
    %1753 = vmatprep.subr.mxu0 0.0
    %1754 = vmatpush1.msra.mxu0 0.0
    %1755 = vmatprep.subr.mxu0 0.0
    %1756 = vmatpush1.msra.mxu0 0.0
    %1757 = vmatprep.subr.mxu0 0.0
    %1758 = vmatpush1.msra.mxu0 0.0
    %1759 = vmatprep.subr.mxu0 0.0
    %1760 = vmatpush1.msra.mxu0 0.0
    %1761 = vmatprep.subr.mxu0 0.0
    %1762 = vmatpush1.msra.mxu0 0.0
    %1763 = vmatprep.subr.mxu0 0.0
    %1764 = vmatpush1.msra.mxu0 0.0
    %1765 = vmatprep.subr.mxu0 0.0
    %1766 = vmatpush1.msra.mxu0 0.0
    %1767 = vmatprep.subr.mxu0 0.0
    %1768 = vmatpush1.msra.mxu0 0.0
    %1769 = vmatprep.subr.mxu0 0.0
    %1770 = vmatpush1.msra.mxu0 0.0
    %1771 = vmatprep.subr.mxu0 0.0
    %1772 = vmatpush1.msra.mxu0 0.0
    %1773 = vmatprep.subr.mxu0 0.0
    %1774 = vmatpush1.msra.mxu0 0.0
    %1775 = vmatprep.subr.mxu0 0.0
    %1776 = vmatpush1.msra.mxu0 0.0
    %1777 = vmatprep.subr.mxu0 0.0
    %1778 = vmatpush1.msra.mxu0 0.0
    %1779 = vmatprep.subr.mxu0 0.0
    %1780 = vmatpush1.msra.mxu0 0.0
    %1781 = vmatprep.subr.mxu0 0.0
    %1782 = vmatpush1.msra.mxu0 0.0
    %1783 = vmatprep.mubr.f32.mxu0 0.0
    %v1784 = vand.u32 %v1490, 4294901760
    %v1785 = vsub.f32 %v1490, %v1784
    %v1786 = vand.u32 %v1785, 4294901760
    %1787 = vmatmul.mubr.f32.gmra.mrb[0].mxu0 %v1786
    %v1788 = vpop.f32.mrb[0].mxu0
    %v1789 = vadd.f32 %v1715, %v1788
    %v1790 = vpop.f32.mrb[0].mxu0
    %1791 = vdwg.mxu0
    %1792 = vmatprep.subr.mxu0 0.0
    %v1793 = vand.u32 %v30, 4294901760
    %v1794 = vsub.f32 %v30, %v1793
    %v1795 = vand.u32 %v1794, 4294901760
    %1796 = vmatpush1.msra.mxu0 %v1795
    %1797 = vmatprep.subr.mxu0 0.0
    %1798 = vmatpush1.msra.mxu0 0.0
    %1799 = vmatprep.subr.mxu0 0.0
    %1800 = vmatpush1.msra.mxu0 0.0
    %1801 = vmatprep.subr.mxu0 0.0
    %1802 = vmatpush1.msra.mxu0 0.0
    %1803 = vmatprep.subr.mxu0 0.0
    %1804 = vmatpush1.msra.mxu0 0.0
    %1805 = vmatprep.subr.mxu0 0.0
    %1806 = vmatpush1.msra.mxu0 0.0
    %1807 = vmatprep.subr.mxu0 0.0
    %1808 = vmatpush1.msra.mxu0 0.0
    %1809 = vmatprep.subr.mxu0 0.0
    %1810 = vmatpush1.msra.mxu0 0.0
    %1811 = vmatprep.subr.mxu0 0.0
    %1812 = vmatpush1.msra.mxu0 0.0
    %1813 = vmatprep.subr.mxu0 0.0
    %1814 = vmatpush1.msra.mxu0 0.0
    %1815 = vmatprep.subr.mxu0 0.0
    %1816 = vmatpush1.msra.mxu0 0.0
    %1817 = vmatprep.subr.mxu0 0.0
    %1818 = vmatpush1.msra.mxu0 0.0
    %1819 = vmatprep.subr.mxu0 0.0
    %1820 = vmatpush1.msra.mxu0 0.0
    %1821 = vmatprep.subr.mxu0 0.0
    %1822 = vmatpush1.msra.mxu0 0.0
    %1823 = vmatprep.subr.mxu0 0.0
    %1824 = vmatpush1.msra.mxu0 0.0
    %1825 = vmatprep.subr.mxu0 0.0
    %1826 = vmatpush1.msra.mxu0 0.0
    %1827 = vmatprep.subr.mxu0 0.0
    %1828 = vmatpush1.msra.mxu0 0.0
    %1829 = vmatprep.subr.mxu0 0.0
    %1830 = vmatpush1.msra.mxu0 0.0
    %1831 = vmatprep.subr.mxu0 0.0
    %1832 = vmatpush1.msra.mxu0 0.0
    %1833 = vmatprep.subr.mxu0 0.0
    %1834 = vmatpush1.msra.mxu0 0.0
    %1835 = vmatprep.subr.mxu0 0.0
    %1836 = vmatpush1.msra.mxu0 0.0
    %1837 = vmatprep.subr.mxu0 0.0
    %1838 = vmatpush1.msra.mxu0 0.0
    %1839 = vmatprep.subr.mxu0 0.0
    %1840 = vmatpush1.msra.mxu0 0.0
    %1841 = vmatprep.subr.mxu0 0.0
    %1842 = vmatpush1.msra.mxu0 0.0
    %1843 = vmatprep.subr.mxu0 0.0
    %1844 = vmatpush1.msra.mxu0 0.0
    %1845 = vmatprep.subr.mxu0 0.0
    %1846 = vmatpush1.msra.mxu0 0.0
    %1847 = vmatprep.subr.mxu0 0.0
    %1848 = vmatpush1.msra.mxu0 0.0
    %1849 = vmatprep.subr.mxu0 0.0
    %1850 = vmatpush1.msra.mxu0 0.0
    %1851 = vmatprep.subr.mxu0 0.0
    %1852 = vmatpush1.msra.mxu0 0.0
    %1853 = vmatprep.subr.mxu0 0.0
    %1854 = vmatpush1.msra.mxu0 0.0
    %1855 = vmatprep.subr.mxu0 0.0
    %1856 = vmatpush1.msra.mxu0 0.0
    %1857 = vmatprep.subr.mxu0 0.0
    %1858 = vmatpush1.msra.mxu0 0.0
    %1859 = vmatprep.mubr.f32.mxu0 0.0
    %v1860 = vand.u32 %v1490, 4294901760
    %1861 = vmatmul.mubr.f32.gmra.mrb[0].mxu0 %v1860
    %v1862 = vpop.f32.mrb[0].mxu0
    %v1863 = vadd.f32 %v1789, %v1862
    %v1864 = vpop.f32.mrb[0].mxu0
    %1865 = vdwg.mxu0
    %1866 = vmatprep.subr.mxu0 0.0
    %v1867 = vand.u32 %v30, 4294901760
    %1868 = vmatpush1.msra.mxu0 %v1867
    %1869 = vmatprep.subr.mxu0 0.0
    %1870 = vmatpush1.msra.mxu0 0.0
    %1871 = vmatprep.subr.mxu0 0.0
    %1872 = vmatpush1.msra.mxu0 0.0
    %1873 = vmatprep.subr.mxu0 0.0
    %1874 = vmatpush1.msra.mxu0 0.0
    %1875 = vmatprep.subr.mxu0 0.0
    %1876 = vmatpush1.msra.mxu0 0.0
    %1877 = vmatprep.subr.mxu0 0.0
    %1878 = vmatpush1.msra.mxu0 0.0
    %1879 = vmatprep.subr.mxu0 0.0
    %1880 = vmatpush1.msra.mxu0 0.0
    %1881 = vmatprep.subr.mxu0 0.0
    %1882 = vmatpush1.msra.mxu0 0.0
    %1883 = vmatprep.subr.mxu0 0.0
    %1884 = vmatpush1.msra.mxu0 0.0
    %1885 = vmatprep.subr.mxu0 0.0
    %1886 = vmatpush1.msra.mxu0 0.0
    %1887 = vmatprep.subr.mxu0 0.0
    %1888 = vmatpush1.msra.mxu0 0.0
    %1889 = vmatprep.subr.mxu0 0.0
    %1890 = vmatpush1.msra.mxu0 0.0
    %1891 = vmatprep.subr.mxu0 0.0
    %1892 = vmatpush1.msra.mxu0 0.0
    %1893 = vmatprep.subr.mxu0 0.0
    %1894 = vmatpush1.msra.mxu0 0.0
    %1895 = vmatprep.subr.mxu0 0.0
    %1896 = vmatpush1.msra.mxu0 0.0
    %1897 = vmatprep.subr.mxu0 0.0
    %1898 = vmatpush1.msra.mxu0 0.0
    %1899 = vmatprep.subr.mxu0 0.0
    %1900 = vmatpush1.msra.mxu0 0.0
    %1901 = vmatprep.subr.mxu0 0.0
    %1902 = vmatpush1.msra.mxu0 0.0
    %1903 = vmatprep.subr.mxu0 0.0
    %1904 = vmatpush1.msra.mxu0 0.0
    %1905 = vmatprep.subr.mxu0 0.0
    %1906 = vmatpush1.msra.mxu0 0.0
    %1907 = vmatprep.subr.mxu0 0.0
    %1908 = vmatpush1.msra.mxu0 0.0
    %1909 = vmatprep.subr.mxu0 0.0
    %1910 = vmatpush1.msra.mxu0 0.0
    %1911 = vmatprep.subr.mxu0 0.0
    %1912 = vmatpush1.msra.mxu0 0.0
    %1913 = vmatprep.subr.mxu0 0.0
    %1914 = vmatpush1.msra.mxu0 0.0
    %1915 = vmatprep.subr.mxu0 0.0
    %1916 = vmatpush1.msra.mxu0 0.0
    %1917 = vmatprep.subr.mxu0 0.0
    %1918 = vmatpush1.msra.mxu0 0.0
    %1919 = vmatprep.subr.mxu0 0.0
    %1920 = vmatpush1.msra.mxu0 0.0
    %1921 = vmatprep.subr.mxu0 0.0
    %1922 = vmatpush1.msra.mxu0 0.0
    %1923 = vmatprep.subr.mxu0 0.0
    %1924 = vmatpush1.msra.mxu0 0.0
    %1925 = vmatprep.subr.mxu0 0.0
    %1926 = vmatpush1.msra.mxu0 0.0
    %1927 = vmatprep.subr.mxu0 0.0
    %1928 = vmatpush1.msra.mxu0 0.0
    %1929 = vmatprep.subr.mxu0 0.0
    %1930 = vmatpush1.msra.mxu0 0.0
    %1931 = vmatprep.mubr.f32.mxu0 0.0
    %v1932 = vand.u32 %v1490, 4294901760
    %1933 = vmatmul.mubr.f32.gmra.mrb[0].mxu0 %v1932
    %v1934 = vpop.f32.mrb[0].mxu0
    %v1935 = vadd.f32 %v1863, %v1934
    %v1936 = vpop.f32.mrb[0].mxu0
    %1937 = vdwg.mxu0
    %v1938 = vrcp.pop %v1035
    %v1939 = vmul.f32 1.0, %v1938
    %v1940 = vrcp.pop %v1038
    %v1941 = vmul.f32 1.0, %v1940
    %v1942 = vmul.f32 %v1486, %v1939
    %v1943 = vmul.f32 %v1935, %v1941
    %vm1944 = vcmask 257024
    %1945 = vst.msk [vmem:[#allocation5] sm:$0xf] %vm1944, %v1942
    %1946 = vst.msk [vmem:[#allocation5 + $0x4] sm:$0xf] %vm1944, %v1943
    // Predicated region
    $region18: #{tpu_custom_call.1} parent=1 // pred_check
      _
    $region19: #{tpu_custom_call.1} parent=1 // pred_check_branch
      %1948 = sbr.rel (0) target = $region21
    $region20: #{tpu_custom_call.1} parent=1 // pred_region
      %s1950 = ssub.s32 128, 128
      %1951 = vsyncadd [#allocation4], %s1950
      %s1952 = sshll.u32 [#allocation5], 4
      %s1953 = int_to_ptr.vmem [resolvable:$true] %s1952
      %1958 = dma.vmem_to_hbm [thread:$0]  %s1953, 128, %s3, [#allocation4], 64, 64, 4
    $region21: #{tpu_custom_call.1} parent=1 // pred_fallthru
      _
    // Predicated region
    $region22: #{tpu_custom_call.1} parent=1 // pred_check
      _
    $region23: #{tpu_custom_call.1} parent=1 // pred_check_branch
      %1960 = sbr.rel (0) target = $region25
    $region24: #{tpu_custom_call.1} parent=1 // pred_region
      %1961 = dma.done [#allocation4], 128
    $region25: #{tpu_custom_call.1} parent=1 // pred_fallthru
      _
    %1962 = vsyncpa [#allocation3], 1
    %1963 = vsyncpa [#allocation4], 1

</llo_original>
